<compile_context>
chip_gen: v5e
topology: v5e:2x2
jax: 0.10.0
libtpu: 0.0.40
codegen_flags: <defaults>
</compile_context>

<pallas_src>
import math

import jax
import jax.numpy as jnp
import numpy as np
from jax import lax
from jax.experimental import pallas as pl
from jax.experimental.pallas import tpu as pltpu


# ----------------------------------------------------------------------------
# Parameter construction (deterministic, mirrors create_window in the module).
# ----------------------------------------------------------------------------
def create_window_1d(window_size: int, sigma: float) -> np.ndarray:
    coords = np.arange(window_size, dtype=np.float32) - (window_size // 2)
    g = np.exp(-(coords ** 2) / (2.0 * sigma ** 2))
    g /= g.sum()
    return g.astype(np.float32)


def _round_up(x: int, m: int) -> int:
    return ((x + m - 1) // m) * m


def _band_matrices(H_pad: int, W: int, g: np.ndarray,
                   Ho: int, Wo: int, Ho_pad: int, Wo_pad: int):
    """Valid-conv band matrices, zero-padded to lane/sublane-aligned outputs.

    img @ Aw == horizontal valid blur (padded output cols are zero)
    Ah @ img == vertical   valid blur (padded output rows are zero)
    """
    ws = g.shape[0]
    Aw = np.zeros((W, Wo_pad), np.float32)
    for j in range(Wo):
        Aw[j:j + ws, j] = g
    Ah = np.zeros((Ho_pad, H_pad), np.float32)
    for i in range(Ho):
        Ah[i, i:i + ws] = g
    return Ah, Aw


# ----------------------------------------------------------------------------
# VMEM budgeting helpers (per-generation: v7x 64 MiB, v5e/v6e 128 MiB).
# ----------------------------------------------------------------------------
def _vmem_capacity_bytes() -> int:
    try:
        cap = int(pltpu.get_tpu_info().vmem_capacity_bytes)
        if cap > 0:
            return cap
    except Exception:
        pass
    return 64 * 1024 * 1024  # conservative fallback (v7x per-TC VMEM)


def _estimate_step_vmem(Bt, C, H_pad, W, Ho_pad, Wo_pad, in_itemsize) -> int:
    """Rough per-grid-step VMEM footprint (tiled-layout padded), in bytes."""
    Wl = _round_up(W, 128)
    n_img = Bt * C
    xy_blocks = 2 * 2 * n_img * H_pad * Wl * in_itemsize   # 2 inputs, double-buffered
    stack = 5 * n_img * H_pad * Wl * 4                     # sublane-stack scratch
    lane = H_pad * 5 * n_img * Wo_pad * 4                  # lane-stack scratch
    aw = 2 * _round_up(W, 8) * Wo_pad * 4
    ah = 2 * Ho_pad * _round_up(H_pad, 128) * 4
    out = 2 * 8 * 128 * 4
    live = 4 * n_img * H_pad * Wl * 4                      # xs/ys/squares live values
    return xy_blocks + stack + lane + aw + ah + out + live


# ----------------------------------------------------------------------------
# Pallas kernel: Bt batch elements per grid step.
# ----------------------------------------------------------------------------
def _make_ssim_kernel(Bt, C, H_pad, W, ws, Ho, Wo, Ho_pad, Wo_pad, C1, C2):
    n_img = Bt * C                 # images fused into this grid step
    M_img = n_img * H_pad          # sublane rows of one stacked quantity
    CW = n_img * Wo_pad            # lanes per blurred quantity (lane-stacked)
    n_wblk = Wo_pad // 128         # 128-lane output blocks (horizontal blur)
    tM_v = min(256, Ho_pad)        # output-row tile for the vertical blur (mult of 8)

    def _recip(d):
        # approx reciprocal on the otherwise-idle EUP slot + 1 Newton-Raphson
        # refinement (2 VPU FMAs); relative error ~eps^2 << 2e-4 tolerance.
        r = pl.reciprocal(d, approx=True)
        return r * (2.0 - d * r)

    def kernel(x_ref, y_ref, aw_ref, ah_ref, out_ref, s_ref, lane_ref):
        f32 = jnp.float32

        # ---- 5-quantity sublane stack written directly into VMEM scratch ----
        # (inputs may be bf16; upcast in-kernel, square in f32)
        xs = x_ref[...].astype(f32).reshape(M_img, W)
        ys = y_ref[...].astype(f32).reshape(M_img, W)
        s_ref[0 * M_img:1 * M_img, :] = xs
        s_ref[1 * M_img:2 * M_img, :] = ys
        s_ref[2 * M_img:3 * M_img, :] = xs * xs
        s_ref[3 * M_img:4 * M_img, :] = ys * ys
        s_ref[4 * M_img:5 * M_img, :] = xs * ys

        # ---- horizontal blur: band-sparse over 128-lane output blocks ----
        # Each output block contracts only the <= (128 + ws - 1) input columns
        # overlapping its band (static window).  Results are scattered
        # straight into the lane-stacked operand of the vertical blur.
        for j in range(n_wblk):
            k0 = j * 128
            k1 = min(k0 + 128 + ws - 1, W)
            tj = jnp.dot(s_ref[:, k0:k1],
                         aw_ref[k0:k1, j * 128:(j + 1) * 128],
                         preferred_element_type=f32)          # (5*M_img, 128)
            for i in range(5 * n_img):
                lane_ref[:, i * Wo_pad + j * 128:
                            i * Wo_pad + (j + 1) * 128] = (
                    tj[i * H_pad:(i + 1) * H_pad, :])

        # ---- vertical blur + elementwise SSIM, band-sparse over row tiles ----
        acc = jnp.zeros((8, 128), f32)
        for r0 in range(0, Ho_pad, tM_v):
            mb = min(tM_v, Ho_pad - r0)                       # multiple of 8
            k0 = r0
            k1 = min(r0 + mb + ws - 1, H_pad)
            ub = jnp.dot(ah_ref[r0:r0 + mb, k0:k1], lane_ref[k0:k1, :],
                         preferred_element_type=f32)          # (mb, 5*CW)

            mu1 = ub[:, 0 * CW:1 * CW]
            mu2 = ub[:, 1 * CW:2 * CW]
            xxf = ub[:, 2 * CW:3 * CW]
            yyf = ub[:, 3 * CW:4 * CW]
            xyf = ub[:, 4 * CW:5 * CW]

            mu1_sq = mu1 * mu1
            mu2_sq = mu2 * mu2
            mu1_mu2 = mu1 * mu2
            sigma1_sq = xxf - mu1_sq
            sigma2_sq = yyf - mu2_sq
            sigma12 = xyf - mu1_mu2

            cs_map = (2.0 * sigma12 + C2) * _recip(sigma1_sq + sigma2_sq + C2)
            cs_map = jnp.maximum(cs_map, 0.0)                 # F.relu
            ssim_map = (2.0 * mu1_mu2 + C1) * _recip(mu1_sq + mu2_sq + C1)
            ssim_map = ssim_map * cs_map

            # In-kernel validity mask (padded rows/cols evaluate to ~1.0 and
            # are excluded); no HBM mask tensor.
            rows = r0 + lax.broadcasted_iota(jnp.int32, (mb, CW), 0)
            cols = lax.broadcasted_iota(jnp.int32, (mb, CW), 1) % Wo_pad
            ssim_map = jnp.where((rows < Ho) & (cols < Wo), ssim_map, 0.0)

            # Partial-sum to a single (8,128) tile: 128-aligned lane-group
            # adds then 8-aligned sublane-group adds (pure VPU, no XLU
            # collapse, no scalar broadcast fill).
            lane_acc = ssim_map[:, 0:128]
            for gblk in range(1, CW // 128):
                lane_acc = lane_acc + ssim_map[:, gblk * 128:(gblk + 1) * 128]
            for s0 in range(0, mb, 8):
                acc = acc + lane_acc[s0:s0 + 8, :]

        out_ref[0, :, :] = acc

    return kernel


# ----------------------------------------------------------------------------
# Wrapper: equivalent of SSIM(window_size, window_sigma, data_range,
#                             use_padding=False, size_average=True).forward
# ----------------------------------------------------------------------------
def ssim_forward(X, Y, *, window_size=11, window_sigma=1.5, data_range=255.0,
                 batch_tile=None):
    assert X.shape == Y.shape and X.ndim == 4
    B, C, H, W = X.shape
    ws = window_size
    Ho, Wo = H - ws + 1, W - ws + 1
    assert Ho > 0 and Wo > 0, "image smaller than window (use_padding=False)"

    H_pad = _round_up(H, 8)       # keeps the (B,C,H,W)->(B*C*H,W) merge aligned
    Ho_pad = _round_up(Ho, 8)
    Wo_pad = _round_up(Wo, 128)

    if H_pad != H:
        pad = ((0, 0), (0, 0), (0, H_pad - H), (0, 0))
        X = jnp.pad(X, pad)
        Y = jnp.pad(Y, pad)

    K1, K2 = 0.01, 0.03
    C1 = (K1 * data_range) ** 2
    C2 = (K2 * data_range) ** 2

    g = create_window_1d(ws, window_sigma)
    Ah_np, Aw_np = _band_matrices(H_pad, W, g, Ho, Wo, Ho_pad, Wo_pad)
    Aw = jnp.asarray(Aw_np)       # (W, Wo_pad)
    Ah = jnp.asarray(Ah_np)       # (Ho_pad, H_pad)

    # ---- per-generation VMEM budgeting + batch-tile selection ----
    cap = _vmem_capacity_bytes()
    budget = int(0.70 * cap)                        # keep double-buffer headroom
    itemsize = X.dtype.itemsize

    if batch_tile is None:
        Bt = 1
        min_steps = 2 if B >= 2 else 1              # keep both v7x TCs busy
        for cand in range(B, 0, -1):
            if B % cand != 0 or B // cand < min_steps:
                continue
            if _estimate_step_vmem(cand, C, H_pad, W, Ho_pad, Wo_pad,
                                   itemsize) > budget:
                continue
            Bt = cand
            break
    else:
        Bt = int(batch_tile)
        assert B % Bt == 0

    est = _estimate_step_vmem(Bt, C, H_pad, W, Ho_pad, Wo_pad, itemsize)
    vmem_limit = max(32 * 1024 * 1024, 2 * est)
    vmem_limit = int(min(vmem_limit, int(0.9 * cap)))

    n_steps = B // Bt
    n_img = Bt * C
    kernel = _make_ssim_kernel(Bt, C, H_pad, W, ws, Ho, Wo, Ho_pad, Wo_pad,
                               C1, C2)

    sums = pl.pallas_call(
        kernel,
        out_shape=jax.ShapeDtypeStruct((n_steps, 8, 128), jnp.float32),
        grid=(n_steps,),
        in_specs=[
            pl.BlockSpec((Bt, C, H_pad, W), lambda b: (b, 0, 0, 0)),
            pl.BlockSpec((Bt, C, H_pad, W), lambda b: (b, 0, 0, 0)),
            # Constant operands (fetched once per step; tiny at these shapes).
            pl.BlockSpec((W, Wo_pad), lambda b: (0, 0)),
            pl.BlockSpec((Ho_pad, H_pad), lambda b: (0, 0)),
        ],
        out_specs=pl.BlockSpec((1, 8, 128), lambda b: (b, 0, 0)),
        scratch_shapes=[
            pltpu.VMEM((5 * n_img * H_pad, W), jnp.float32),        # sublane stack
            pltpu.VMEM((H_pad, 5 * n_img * Wo_pad), jnp.float32),   # lane stack
        ],
        compiler_params=pltpu.CompilerParams(
            dimension_semantics=("parallel",),
            vmem_limit_bytes=vmem_limit,
        ),
    )(X, Y, Aw, Ah)

    # Every image contributes the same number of valid pixels, so the global
    # mean of valid pixels equals the batch-mean of per-image means
    # (size_average=True).
    return jnp.sum(sums) / float(B * C * Ho * Wo)


# ----------------------------------------------------------------------------
# Pure-JAX reference (grouped conv2d, mirrors the PyTorch code) for validation.
# ----------------------------------------------------------------------------
def ssim_forward_ref(X, Y, *, window_size=11, window_sigma=1.5,
                     data_range=255.0):
    B, C, H, W = X.shape
    K1, K2 = 0.01, 0.03
    C1 = (K1 * data_range) ** 2
    C2 = (K2 * data_range) ** 2
    g = jnp.asarray(create_window_1d(window_size, window_sigma))
    w_row = jnp.broadcast_to(g.reshape(1, 1, 1, -1), (C, 1, 1, window_size))
    w_col = jnp.transpose(w_row, (0, 1, 3, 2))

    def filt(x):
        o = lax.conv_general_dilated(
            x, w_row, (1, 1), "VALID",
            dimension_numbers=("NCHW", "OIHW", "NCHW"), feature_group_count=C)
        o = lax.conv_general_dilated(
            o, w_col, (1, 1), "VALID",
            dimension_numbers=("NCHW", "OIHW", "NCHW"), feature_group_count=C)
        return o

    Xf, Yf = X.astype(jnp.float32), Y.astype(jnp.float32)
    mu1, mu2 = filt(Xf), filt(Yf)
    s1 = filt(Xf * Xf) - mu1 ** 2
    s2 = filt(Yf * Yf) - mu2 ** 2
    s12 = filt(Xf * Yf) - mu1 * mu2
    cs_map = jnp.maximum((2 * s12 + C2) / (s1 + s2 + C2), 0.0)
    ssim_map = (2 * mu1 * mu2 + C1) / (mu1 ** 2 + mu2 ** 2 + C1) * cs_map
    return jnp.mean(jnp.mean(ssim_map, axis=(1, 2, 3)))


if __name__ == "__main__":
    key = jax.random.PRNGKey(0)
    kx, ky = jax.random.split(key)
    B, C, H, W = 2, 3, 16, 16          # channel=3 matches the module default
    X = jax.random.uniform(kx, (B, C, H, W), jnp.float32) * 255.0
    Y = jax.random.uniform(ky, (B, C, H, W), jnp.float32) * 255.0

    out = jax.block_until_ready(ssim_forward(X, Y))
    ref = jax.block_until_ready(ssim_forward_ref(X, Y))
    assert out.shape == () and out.dtype == jnp.float32
    assert math.isfinite(float(out))
    np.testing.assert_allclose(np.asarray(out), np.asarray(ref),
                               rtol=2e-4, atol=2e-5)

    # Also exercise the fused-batch path (Bt > 1 per grid step).
    kx2, ky2 = jax.random.split(jax.random.PRNGKey(1))
    X2 = jax.random.uniform(kx2, (4, C, H, W), jnp.float32) * 255.0
    Y2 = jax.random.uniform(ky2, (4, C, H, W), jnp.float32) * 255.0
    out2 = jax.block_until_ready(ssim_forward(X2, Y2))
    ref2 = jax.block_until_ready(ssim_forward_ref(X2, Y2))
    np.testing.assert_allclose(np.asarray(out2), np.asarray(ref2),
                               rtol=2e-4, atol=2e-5)

    print("KERNEL_OK")
</pallas_src>

<mosaic_0001>
module attributes {stable_mosaic.version = 11 : i64} {
  func.func @kernel(%arg0: i32, %arg1: memref<1x3x16x16xf32, #tpu.memory_space<vmem>>, %arg2: memref<1x3x16x16xf32, #tpu.memory_space<vmem>>, %arg3: memref<16x128xf32, #tpu.memory_space<vmem>>, %arg4: memref<8x16xf32, #tpu.memory_space<vmem>>, %arg5: memref<1x8x128xf32, #tpu.memory_space<vmem>>, %arg6: memref<240x16xf32, #tpu.memory_space<vmem>>, %arg7: memref<16x1920xf32, #tpu.memory_space<vmem>>) attributes {dimension_semantics = [#tpu.dimension_semantics<parallel>], iteration_bounds = array<i64: 2>, scalar_prefetch = 0 : i64, scratch_operands = 2 : i64, tpu.core_type = #tpu.core_type<tc>, window_params = [{transform_indices = @transform_0, window_bounds = array<i64: 1, 3, 16, 16>}, {transform_indices = @transform_1, window_bounds = array<i64: 1, 3, 16, 16>}, {pipeline_mode = #tpu.pipeline_mode<synchronous>, transform_indices = @transform_2, window_bounds = array<i64: 16, 128>}, {pipeline_mode = #tpu.pipeline_mode<synchronous>, transform_indices = @transform_3, window_bounds = array<i64: 8, 16>}, {transform_indices = @transform_4, window_bounds = array<i64: 1, 8, 128>}]} {
    %c0 = arith.constant 0 : index
    %c0_0 = arith.constant 0 : index
    %c0_1 = arith.constant 0 : index
    %c0_2 = arith.constant 0 : index
    %0 = vector.load %arg1[%c0, %c0_0, %c0_1, %c0_2] : memref<1x3x16x16xf32, #tpu.memory_space<vmem>>, vector<1x3x16x16xf32>
    %1 = vector.shape_cast %0 : vector<1x3x16x16xf32> to vector<48x16xf32>
    %c0_3 = arith.constant 0 : index
    %c0_4 = arith.constant 0 : index
    %c0_5 = arith.constant 0 : index
    %c0_6 = arith.constant 0 : index
    %2 = vector.load %arg2[%c0_3, %c0_4, %c0_5, %c0_6] : memref<1x3x16x16xf32, #tpu.memory_space<vmem>>, vector<1x3x16x16xf32>
    %3 = vector.shape_cast %2 : vector<1x3x16x16xf32> to vector<48x16xf32>
    %c0_7 = arith.constant 0 : index
    %c0_8 = arith.constant 0 : index
    %4 = vector.load %arg6[%c0_7, %c0_8] : memref<240x16xf32, #tpu.memory_space<vmem>>, vector<48x16xf32>
    tpu.vector_store %arg6[%c0_7, %c0_8], %1 {strides = array<i32>} : memref<240x16xf32, #tpu.memory_space<vmem>>, vector<48x16xf32>,
    %c48 = arith.constant 48 : index
    %c0_9 = arith.constant 0 : index
    %5 = vector.load %arg6[%c48, %c0_9] : memref<240x16xf32, #tpu.memory_space<vmem>>, vector<48x16xf32>
    tpu.vector_store %arg6[%c48, %c0_9], %3 {strides = array<i32>} : memref<240x16xf32, #tpu.memory_space<vmem>>, vector<48x16xf32>,
    %6 = arith.mulf %1, %1 : vector<48x16xf32>
    %c96 = arith.constant 96 : index
    %c0_10 = arith.constant 0 : index
    %7 = vector.load %arg6[%c96, %c0_10] : memref<240x16xf32, #tpu.memory_space<vmem>>, vector<48x16xf32>
    tpu.vector_store %arg6[%c96, %c0_10], %6 {strides = array<i32>} : memref<240x16xf32, #tpu.memory_space<vmem>>, vector<48x16xf32>,
    %8 = arith.mulf %3, %3 : vector<48x16xf32>
    %c144 = arith.constant 144 : index
    %c0_11 = arith.constant 0 : index
    %9 = vector.load %arg6[%c144, %c0_11] : memref<240x16xf32, #tpu.memory_space<vmem>>, vector<48x16xf32>
    tpu.vector_store %arg6[%c144, %c0_11], %8 {strides = array<i32>} : memref<240x16xf32, #tpu.memory_space<vmem>>, vector<48x16xf32>,
    %10 = arith.mulf %1, %3 : vector<48x16xf32>
    %c192 = arith.constant 192 : index
    %c0_12 = arith.constant 0 : index
    %11 = vector.load %arg6[%c192, %c0_12] : memref<240x16xf32, #tpu.memory_space<vmem>>, vector<48x16xf32>
    tpu.vector_store %arg6[%c192, %c0_12], %10 {strides = array<i32>} : memref<240x16xf32, #tpu.memory_space<vmem>>, vector<48x16xf32>,
    %c0_13 = arith.constant 0 : index
    %c0_14 = arith.constant 0 : index
    %12 = vector.load %arg6[%c0_13, %c0_14] : memref<240x16xf32, #tpu.memory_space<vmem>>, vector<240x16xf32>
    %c0_15 = arith.constant 0 : index
    %c0_16 = arith.constant 0 : index
    %13 = vector.load %arg3[%c0_15, %c0_16] : memref<16x128xf32, #tpu.memory_space<vmem>>, vector<16x128xf32>
    %cst = arith.constant dense<0.000000e+00> : vector<240x128xf32>
    %14 = tpu.matmul %12, %13, %cst {dimension_numbers = #tpu.dot_dimension_numbers<[1], [0], [0], [1], [0, 0, 1, 1], [], []>} : vector<240x16xf32>, vector<16x128xf32>, vector<240x128xf32> -> vector<240x128xf32>
    %15 = vector.extract_strided_slice %14 {offsets = [0, 0], sizes = [16, 128], strides = [1, 1]} : vector<240x128xf32> to vector<16x128xf32>
    %c0_17 = arith.constant 0 : index
    %c0_18 = arith.constant 0 : index
    %16 = vector.load %arg7[%c0_17, %c0_18] : memref<16x1920xf32, #tpu.memory_space<vmem>>, vector<16x128xf32>
    tpu.vector_store %arg7[%c0_17, %c0_18], %15 {strides = array<i32>} : memref<16x1920xf32, #tpu.memory_space<vmem>>, vector<16x128xf32>,
    %17 = vector.extract_strided_slice %14 {offsets = [16, 0], sizes = [16, 128], strides = [1, 1]} : vector<240x128xf32> to vector<16x128xf32>
    %c0_19 = arith.constant 0 : index
    %c128 = arith.constant 128 : index
    %18 = vector.load %arg7[%c0_19, %c128] : memref<16x1920xf32, #tpu.memory_space<vmem>>, vector<16x128xf32>
    tpu.vector_store %arg7[%c0_19, %c128], %17 {strides = array<i32>} : memref<16x1920xf32, #tpu.memory_space<vmem>>, vector<16x128xf32>,
    %19 = vector.extract_strided_slice %14 {offsets = [32, 0], sizes = [16, 128], strides = [1, 1]} : vector<240x128xf32> to vector<16x128xf32>
    %c0_20 = arith.constant 0 : index
    %c256 = arith.constant 256 : index
    %20 = vector.load %arg7[%c0_20, %c256] : memref<16x1920xf32, #tpu.memory_space<vmem>>, vector<16x128xf32>
    tpu.vector_store %arg7[%c0_20, %c256], %19 {strides = array<i32>} : memref<16x1920xf32, #tpu.memory_space<vmem>>, vector<16x128xf32>,
    %21 = vector.extract_strided_slice %14 {offsets = [48, 0], sizes = [16, 128], strides = [1, 1]} : vector<240x128xf32> to vector<16x128xf32>
    %c0_21 = arith.constant 0 : index
    %c384 = arith.constant 384 : index
    %22 = vector.load %arg7[%c0_21, %c384] : memref<16x1920xf32, #tpu.memory_space<vmem>>, vector<16x128xf32>
    tpu.vector_store %arg7[%c0_21, %c384], %21 {strides = array<i32>} : memref<16x1920xf32, #tpu.memory_space<vmem>>, vector<16x128xf32>,
    %23 = vector.extract_strided_slice %14 {offsets = [64, 0], sizes = [16, 128], strides = [1, 1]} : vector<240x128xf32> to vector<16x128xf32>
    %c0_22 = arith.constant 0 : index
    %c512 = arith.constant 512 : index
    %24 = vector.load %arg7[%c0_22, %c512] : memref<16x1920xf32, #tpu.memory_space<vmem>>, vector<16x128xf32>
    tpu.vector_store %arg7[%c0_22, %c512], %23 {strides = array<i32>} : memref<16x1920xf32, #tpu.memory_space<vmem>>, vector<16x128xf32>,
    %25 = vector.extract_strided_slice %14 {offsets = [80, 0], sizes = [16, 128], strides = [1, 1]} : vector<240x128xf32> to vector<16x128xf32>
    %c0_23 = arith.constant 0 : index
    %c640 = arith.constant 640 : index
    %26 = vector.load %arg7[%c0_23, %c640] : memref<16x1920xf32, #tpu.memory_space<vmem>>, vector<16x128xf32>
    tpu.vector_store %arg7[%c0_23, %c640], %25 {strides = array<i32>} : memref<16x1920xf32, #tpu.memory_space<vmem>>, vector<16x128xf32>,
    %27 = vector.extract_strided_slice %14 {offsets = [96, 0], sizes = [16, 128], strides = [1, 1]} : vector<240x128xf32> to vector<16x128xf32>
    %c0_24 = arith.constant 0 : index
    %c768 = arith.constant 768 : index
    %28 = vector.load %arg7[%c0_24, %c768] : memref<16x1920xf32, #tpu.memory_space<vmem>>, vector<16x128xf32>
    tpu.vector_store %arg7[%c0_24, %c768], %27 {strides = array<i32>} : memref<16x1920xf32, #tpu.memory_space<vmem>>, vector<16x128xf32>,
    %29 = vector.extract_strided_slice %14 {offsets = [112, 0], sizes = [16, 128], strides = [1, 1]} : vector<240x128xf32> to vector<16x128xf32>
    %c0_25 = arith.constant 0 : index
    %c896 = arith.constant 896 : index
    %30 = vector.load %arg7[%c0_25, %c896] : memref<16x1920xf32, #tpu.memory_space<vmem>>, vector<16x128xf32>
    tpu.vector_store %arg7[%c0_25, %c896], %29 {strides = array<i32>} : memref<16x1920xf32, #tpu.memory_space<vmem>>, vector<16x128xf32>,
    %31 = vector.extract_strided_slice %14 {offsets = [128, 0], sizes = [16, 128], strides = [1, 1]} : vector<240x128xf32> to vector<16x128xf32>
    %c0_26 = arith.constant 0 : index
    %c1024 = arith.constant 1024 : index
    %32 = vector.load %arg7[%c0_26, %c1024] : memref<16x1920xf32, #tpu.memory_space<vmem>>, vector<16x128xf32>
    tpu.vector_store %arg7[%c0_26, %c1024], %31 {strides = array<i32>} : memref<16x1920xf32, #tpu.memory_space<vmem>>, vector<16x128xf32>,
    %33 = vector.extract_strided_slice %14 {offsets = [144, 0], sizes = [16, 128], strides = [1, 1]} : vector<240x128xf32> to vector<16x128xf32>
    %c0_27 = arith.constant 0 : index
    %c1152 = arith.constant 1152 : index
    %34 = vector.load %arg7[%c0_27, %c1152] : memref<16x1920xf32, #tpu.memory_space<vmem>>, vector<16x128xf32>
    tpu.vector_store %arg7[%c0_27, %c1152], %33 {strides = array<i32>} : memref<16x1920xf32, #tpu.memory_space<vmem>>, vector<16x128xf32>,
    %35 = vector.extract_strided_slice %14 {offsets = [160, 0], sizes = [16, 128], strides = [1, 1]} : vector<240x128xf32> to vector<16x128xf32>
    %c0_28 = arith.constant 0 : index
    %c1280 = arith.constant 1280 : index
    %36 = vector.load %arg7[%c0_28, %c1280] : memref<16x1920xf32, #tpu.memory_space<vmem>>, vector<16x128xf32>
    tpu.vector_store %arg7[%c0_28, %c1280], %35 {strides = array<i32>} : memref<16x1920xf32, #tpu.memory_space<vmem>>, vector<16x128xf32>,
    %37 = vector.extract_strided_slice %14 {offsets = [176, 0], sizes = [16, 128], strides = [1, 1]} : vector<240x128xf32> to vector<16x128xf32>
    %c0_29 = arith.constant 0 : index
    %c1408 = arith.constant 1408 : index
    %38 = vector.load %arg7[%c0_29, %c1408] : memref<16x1920xf32, #tpu.memory_space<vmem>>, vector<16x128xf32>
    tpu.vector_store %arg7[%c0_29, %c1408], %37 {strides = array<i32>} : memref<16x1920xf32, #tpu.memory_space<vmem>>, vector<16x128xf32>,
    %39 = vector.extract_strided_slice %14 {offsets = [192, 0], sizes = [16, 128], strides = [1, 1]} : vector<240x128xf32> to vector<16x128xf32>
    %c0_30 = arith.constant 0 : index
    %c1536 = arith.constant 1536 : index
    %40 = vector.load %arg7[%c0_30, %c1536] : memref<16x1920xf32, #tpu.memory_space<vmem>>, vector<16x128xf32>
    tpu.vector_store %arg7[%c0_30, %c1536], %39 {strides = array<i32>} : memref<16x1920xf32, #tpu.memory_space<vmem>>, vector<16x128xf32>,
    %41 = vector.extract_strided_slice %14 {offsets = [208, 0], sizes = [16, 128], strides = [1, 1]} : vector<240x128xf32> to vector<16x128xf32>
    %c0_31 = arith.constant 0 : index
    %c1664 = arith.constant 1664 : index
    %42 = vector.load %arg7[%c0_31, %c1664] : memref<16x1920xf32, #tpu.memory_space<vmem>>, vector<16x128xf32>
    tpu.vector_store %arg7[%c0_31, %c1664], %41 {strides = array<i32>} : memref<16x1920xf32, #tpu.memory_space<vmem>>, vector<16x128xf32>,
    %43 = vector.extract_strided_slice %14 {offsets = [224, 0], sizes = [16, 128], strides = [1, 1]} : vector<240x128xf32> to vector<16x128xf32>
    %c0_32 = arith.constant 0 : index
    %c1792 = arith.constant 1792 : index
    %44 = vector.load %arg7[%c0_32, %c1792] : memref<16x1920xf32, #tpu.memory_space<vmem>>, vector<16x128xf32>
    tpu.vector_store %arg7[%c0_32, %c1792], %43 {strides = array<i32>} : memref<16x1920xf32, #tpu.memory_space<vmem>>, vector<16x128xf32>,
    %cst_33 = arith.constant 0.000000e+00 : f32
    %45 = vector.broadcast %cst_33 : f32 to vector<8x128xf32>
    %c0_34 = arith.constant 0 : index
    %c0_35 = arith.constant 0 : index
    %46 = vector.load %arg4[%c0_34, %c0_35] : memref<8x16xf32, #tpu.memory_space<vmem>>, vector<8x16xf32>
    %c0_36 = arith.constant 0 : index
    %c0_37 = arith.constant 0 : index
    %47 = vector.load %arg7[%c0_36, %c0_37] : memref<16x1920xf32, #tpu.memory_space<vmem>>, vector<16x1920xf32>
    %cst_38 = arith.constant dense<0.000000e+00> : vector<8x1920xf32>
    %48 = tpu.matmul %46, %47, %cst_38 {dimension_numbers = #tpu.dot_dimension_numbers<[1], [0], [0], [1], [0, 0, 1, 1], [], []>} : vector<8x16xf32>, vector<16x1920xf32>, vector<8x1920xf32> -> vector<8x1920xf32>
    %49 = vector.extract_strided_slice %48 {offsets = [0, 0], sizes = [8, 384], strides = [1, 1]} : vector<8x1920xf32> to vector<8x384xf32>
    %50 = vector.extract_strided_slice %48 {offsets = [0, 384], sizes = [8, 384], strides = [1, 1]} : vector<8x1920xf32> to vector<8x384xf32>
    %51 = vector.extract_strided_slice %48 {offsets = [0, 768], sizes = [8, 384], strides = [1, 1]} : vector<8x1920xf32> to vector<8x384xf32>
    %52 = vector.extract_strided_slice %48 {offsets = [0, 1152], sizes = [8, 384], strides = [1, 1]} : vector<8x1920xf32> to vector<8x384xf32>
    %53 = vector.extract_strided_slice %48 {offsets = [0, 1536], sizes = [8, 384], strides = [1, 1]} : vector<8x1920xf32> to vector<8x384xf32>
    %54 = arith.mulf %49, %49 : vector<8x384xf32>
    %55 = arith.mulf %50, %50 : vector<8x384xf32>
    %56 = arith.mulf %49, %50 : vector<8x384xf32>
    %57 = arith.subf %51, %54 : vector<8x384xf32>
    %58 = arith.subf %52, %55 : vector<8x384xf32>
    %59 = arith.subf %53, %56 : vector<8x384xf32>
    %cst_39 = arith.constant 2.000000e+00 : f32
    %60 = vector.broadcast %cst_39 : f32 to vector<8x384xf32>
    %61 = arith.mulf %60, %59 : vector<8x384xf32>
    %cst_40 = arith.constant 5.852250e+01 : f32
    %62 = vector.broadcast %cst_40 : f32 to vector<8x384xf32>
    %63 = arith.addf %61, %62 : vector<8x384xf32>
    %64 = arith.addf %57, %58 : vector<8x384xf32>
    %cst_41 = arith.constant 5.852250e+01 : f32
    %65 = vector.broadcast %cst_41 : f32 to vector<8x384xf32>
    %66 = arith.addf %64, %65 : vector<8x384xf32>
    %67 = tpu.reciprocal %66 {approx = true} : vector<8x384xf32> -> vector<8x384xf32>
    %68 = arith.mulf %66, %67 : vector<8x384xf32>
    %cst_42 = arith.constant 2.000000e+00 : f32
    %69 = vector.broadcast %cst_42 : f32 to vector<8x384xf32>
    %70 = arith.subf %69, %68 : vector<8x384xf32>
    %71 = arith.mulf %67, %70 : vector<8x384xf32>
    %72 = arith.mulf %63, %71 : vector<8x384xf32>
    %cst_43 = arith.constant 0.000000e+00 : f32
    %73 = vector.broadcast %cst_43 : f32 to vector<8x384xf32>
    %74 = arith.maximumf %72, %73 : vector<8x384xf32>
    %cst_44 = arith.constant 2.000000e+00 : f32
    %75 = vector.broadcast %cst_44 : f32 to vector<8x384xf32>
    %76 = arith.mulf %75, %56 : vector<8x384xf32>
    %cst_45 = arith.constant 6.502500e+00 : f32
    %77 = vector.broadcast %cst_45 : f32 to vector<8x384xf32>
    %78 = arith.addf %76, %77 : vector<8x384xf32>
    %79 = arith.addf %54, %55 : vector<8x384xf32>
    %cst_46 = arith.constant 6.502500e+00 : f32
    %80 = vector.broadcast %cst_46 : f32 to vector<8x384xf32>
    %81 = arith.addf %79, %80 : vector<8x384xf32>
    %82 = tpu.reciprocal %81 {approx = true} : vector<8x384xf32> -> vector<8x384xf32>
    %83 = arith.mulf %81, %82 : vector<8x384xf32>
    %cst_47 = arith.constant 2.000000e+00 : f32
    %84 = vector.broadcast %cst_47 : f32 to vector<8x384xf32>
    %85 = arith.subf %84, %83 : vector<8x384xf32>
    %86 = arith.mulf %82, %85 : vector<8x384xf32>
    %87 = arith.mulf %78, %86 : vector<8x384xf32>
    %88 = arith.mulf %87, %74 : vector<8x384xf32>
    %89 = tpu.iota {dimensions = array<i32: 0>} : vector<8x384xi32>
    %c0_i32 = arith.constant 0 : i32
    %90 = vector.broadcast %c0_i32 : i32 to vector<8x384xi32>
    %91 = arith.addi %90, %89 : vector<8x384xi32>
    %92 = tpu.iota {dimensions = array<i32: 1>} : vector<8x384xi32>
    %c128_i32 = arith.constant 128 : i32
    %c0_i32_48 = arith.constant 0 : i32
    %93 = arith.cmpi eq, %c128_i32, %c0_i32_48 : i32
    %c1_i32 = arith.constant 1 : i32
    %94 = arith.select %93, %c1_i32, %c128_i32 : i32
    %95 = vector.broadcast %94 : i32 to vector<8x384xi32>
    %96 = arith.remsi %92, %95 : vector<8x384xi32>
    %c0_i32_49 = arith.constant 0 : i32
    %97 = vector.broadcast %c0_i32_49 : i32 to vector<8x384xi32>
    %98 = arith.cmpi ne, %96, %97 : vector<8x384xi32>
    %c0_i32_50 = arith.constant 0 : i32
    %99 = vector.broadcast %c0_i32_50 : i32 to vector<8x384xi32>
    %100 = arith.cmpi slt, %96, %99 : vector<8x384xi32>
    %c0_i32_51 = arith.constant 0 : i32
    %101 = arith.cmpi slt, %94, %c0_i32_51 : i32
    %102 = vector.broadcast %101 : i1 to vector<8x384xi1>
    %103 = vector.broadcast %102 : vector<8x384xi1> to vector<8x384xi1>
    %104 = arith.xori %100, %103 : vector<8x384xi1>
    %105 = arith.andi %104, %98 : vector<8x384xi1>
    %106 = vector.broadcast %94 : i32 to vector<8x384xi32>
    %107 = arith.addi %96, %106 : vector<8x384xi32>
    %108 = arith.select %105, %107, %96 : vector<8x384xi1>, vector<8x384xi32>
    %c6_i32 = arith.constant 6 : i32
    %109 = vector.broadcast %c6_i32 : i32 to vector<8x384xi32>
    %110 = arith.cmpi slt, %91, %109 : vector<8x384xi32>
    %c6_i32_52 = arith.constant 6 : i32
    %111 = vector.broadcast %c6_i32_52 : i32 to vector<8x384xi32>
    %112 = arith.cmpi slt, %108, %111 : vector<8x384xi32>
    %113 = arith.andi %110, %112 : vector<8x384xi1>
    %cst_53 = arith.constant 0.000000e+00 : f32
    %114 = vector.broadcast %cst_53 : f32 to vector<8x384xf32>
    %115 = arith.select %113, %88, %114 : vector<8x384xi1>, vector<8x384xf32>
    %116 = vector.extract_strided_slice %115 {offsets = [0, 0], sizes = [8, 128], strides = [1, 1]} : vector<8x384xf32> to vector<8x128xf32>
    %117 = vector.extract_strided_slice %115 {offsets = [0, 128], sizes = [8, 128], strides = [1, 1]} : vector<8x384xf32> to vector<8x128xf32>
    %118 = arith.addf %116, %117 : vector<8x128xf32>
    %119 = vector.extract_strided_slice %115 {offsets = [0, 256], sizes = [8, 128], strides = [1, 1]} : vector<8x384xf32> to vector<8x128xf32>
    %120 = arith.addf %118, %119 : vector<8x128xf32>
    %121 = arith.addf %45, %120 : vector<8x128xf32>
    %c0_54 = arith.constant 0 : index
    %c0_55 = arith.constant 0 : index
    %c0_56 = arith.constant 0 : index
    %122 = vector.load %arg5[%c0_54, %c0_55, %c0_56] : memref<1x8x128xf32, #tpu.memory_space<vmem>>, vector<1x8x128xf32>
    %123 = vector.shape_cast %122 : vector<1x8x128xf32> to vector<8x128xf32>
    %124 = vector.shape_cast %121 : vector<8x128xf32> to vector<1x8x128xf32>
    tpu.vector_store %arg5[%c0_54, %c0_55, %c0_56], %124 {strides = array<i32>} : memref<1x8x128xf32, #tpu.memory_space<vmem>>, vector<1x8x128xf32>,
    return
  }
  func.func @transform_0(%arg0: i32) -> (i32, i32, i32, i32) {
    %c0_i32 = arith.constant 0 : i32
    %c0_i32_0 = arith.constant 0 : i32
    %c0_i32_1 = arith.constant 0 : i32
    %c0_i32_2 = arith.constant 0 : i32
    return %arg0, %c0_i32, %c0_i32_0, %c0_i32_1 : i32, i32, i32, i32
  }
  func.func @transform_1(%arg0: i32) -> (i32, i32, i32, i32) {
    %c0_i32 = arith.constant 0 : i32
    %c0_i32_0 = arith.constant 0 : i32
    %c0_i32_1 = arith.constant 0 : i32
    %c0_i32_2 = arith.constant 0 : i32
    return %arg0, %c0_i32, %c0_i32_0, %c0_i32_1 : i32, i32, i32, i32
  }
  func.func @transform_2(%arg0: i32) -> (i32, i32) {
    %c0_i32 = arith.constant 0 : i32
    %c0_i32_0 = arith.constant 0 : i32
    %c0_i32_1 = arith.constant 0 : i32
    return %c0_i32, %c0_i32_0 : i32, i32
  }
  func.func @transform_3(%arg0: i32) -> (i32, i32) {
    %c0_i32 = arith.constant 0 : i32
    %c0_i32_0 = arith.constant 0 : i32
    %c0_i32_1 = arith.constant 0 : i32
    return %c0_i32, %c0_i32_0 : i32, i32
  }
  func.func @transform_4(%arg0: i32) -> (i32, i32, i32) {
    %c0_i32 = arith.constant 0 : i32
    %c0_i32_0 = arith.constant 0 : i32
    %c0_i32_1 = arith.constant 0 : i32
    return %arg0, %c0_i32, %c0_i32_0 : i32, i32, i32
  }
}

</mosaic_0001>

<llo_original>
// kernel: tpu_custom_call.1
$region0: #{tpu_custom_call.1}
  #allocation0 [shape = 'u32[]', space=smem, size = 0x4, offset = 0x4, fixed_abs, tag = 'smem constant byte address 0x4 - core index']
  #allocation1 [shape = 'u32[72,128]{1,0:T(1,128)}', space=vmem, size = 0x9000, scoped, tag = 'internal scratch']
  #allocation2 [shape = 'f32[240,16]{1,0:T(8,128)}', space=vmem, size = 0x1e000, scoped, tag = 'scratch operand']
  #allocation3 [shape = 'f32[16,1920]{1,0:T(8,128)}', space=vmem, size = 0x1e000, scoped, tag = 'scratch operand']
  %s0 = inlined_call_operand.hbm [shape: f32[2,3,16,16], index: 0, kind: input, shape index: {}]
  %s1 = inlined_call_operand.hbm [shape: f32[2,3,16,16], index: 1, kind: input, shape index: {}]
  %s2 = inlined_call_operand.hbm [shape: f32[16,128], index: 2, kind: input, shape index: {}]
  %s3 = inlined_call_operand.hbm [shape: f32[8,16], index: 3, kind: input, shape index: {}]
  %s4 = inlined_call_operand.hbm [shape: f32[2,8,128], index: 4, kind: output, shape index: {}]
  %s5 = sld [smem:[#allocation0]]
  $region65: #{tpu_custom_call.1} parent=0
    _
  %s7 = ssub.s32 1, %s5
  %s8 = scalar_select 0, %s7, %s5
  $region1: #{tpu_custom_call.1} parent=0
    #allocation4 [shape = 'u8[49152]{0}', space=vmem, size = 0xc000, scoped, tag = 'input window, operand 0']
    #allocation5 [shape = 's32[2]{0}', space=sflag, size = 0x8, scoped, tag = 'scoped memory for tpu_custom_call.1']
    #allocation6 [shape = 's32[2]{0}', space=sflag, size = 0x8, scoped, tag = 'scoped memory for tpu_custom_call.1']
    #allocation7 [shape = 'u8[49152]{0}', space=vmem, size = 0xc000, scoped, tag = 'input window, operand 1']
    #allocation8 [shape = 's32[2]{0}', space=sflag, size = 0x8, scoped, tag = 'scoped memory for tpu_custom_call.1']
    #allocation9 [shape = 'u8[8192]{0}', space=vmem, size = 0x2000, scoped, tag = 'input window, operand 2, single buffered']
    #allocation10 [shape = 'u8[4096]{0}', space=vmem, size = 0x1000, scoped, tag = 'input window, operand 3, single buffered']
    #allocation11 [shape = 's32[1]{0}', space=sflag, size = 0x4, scoped, tag = 'scoped memory for tpu_custom_call.1']
    #allocation12 [shape = 'u8[8192]{0}', space=vmem, size = 0x2000, scoped, tag = 'output window, operand 0']
    %9 = vsyncpa [#allocation5], 0
    %s10 = scalar_lea.sflag [#allocation5], 1
    %11 = vsyncpa %s10, 0
    %12 = vsyncpa [#allocation8], 0
    %s13 = scalar_lea.sflag [#allocation8], 1
    %14 = vsyncpa %s13, 0
    %15 = vsyncpa [#allocation11], 0
    %16 = vsyncpa [#allocation6], 0
    %s17 = scalar_lea.sflag [#allocation6], 1
    %18 = vsyncpa %s17, 0
    loop: start=0, step=1, limit=4
    $region2: #{tpu_custom_call.1} parent=1 // loop_pre_header
      _
    $region3: #{tpu_custom_call.1} parent=1 // loop_header
      %s20 = sphi 0, %s24
      %p21 = scmp.ge.s32.totalorder %s20, 4
      %s30 = sphi 0, %s32
      %s33 = sphi 0, %s30
      %s34 = sphi 0, %s33
      %s50 = sphi 0, %s34
      %s56 = sphi 0, %s58
      %s59 = sphi 0, %s56
      %s60 = sphi 0, %s59
      %s76 = sphi 0, %s60
      %s80 = sphi 0, %s80
      %s82 = sphi 0, %s80
      %s83 = sphi 0, %s82
      %s97 = sphi 0, %s83
      %s101 = sphi 0, %s101
      %s103 = sphi 0, %s101
      %s104 = sphi 0, %s103
      %s118 = sphi 0, %s104
      %s124 = sphi 0, %s126
      %s127 = sphi 0, %s124
      %s128 = sphi 0, %s127
      %s144 = sphi 0, %s128
    $region4: #{tpu_custom_call.1} parent=1 // loop_header_branch
      %23 = sbr.rel (%p21) target = $region8
    $region5: #{tpu_custom_call.1} parent=1 // loop_body
      %s25 = ssub.s32 %s20, 1
      %s26 = ssub.s32 %s20, 2
      %s27 = sadd.s32 %s20, 1
      %s28 = ssub.s32 %s20, %s27
      %p29 = scmp.eq.s32.totalorder %s28, 0
      %s31 = sadd.s32 %s30, 1
      %s32 = scalar_select %p29, %s30, %s31
      %p35 = pneg %p29
      %p36 = scmp.eq.s32.totalorder %s20, 1
      %p37 = por %p35, %p36
      %p38 = scmp.ne.s32.totalorder %s30, %s33
      %p39 = scmp.eq.s32.totalorder %s20, 0
      %p40 = por %p38, %p39
      %p41 = scmp.ne.s32.totalorder %s30, %s33
      %p42 = scmp.eq.s32.totalorder %s25, 1
      %p43 = por %p41, %p42
      %p44 = scmp.ne.s32.totalorder %s33, %s34
      %p45 = scmp.eq.s32.totalorder %s25, 0
      %p46 = por %p44, %p45
      %p47 = scmp.ne.s32.totalorder %s33, %s34
      %p48 = scmp.eq.s32.totalorder %s26, 1
      %p49 = por %p47, %p48
      %p51 = scmp.ne.s32.totalorder %s34, %s50
      %p52 = scmp.eq.s32.totalorder %s26, 0
      %p53 = por %p51, %p52
      %s54 = ssub.s32 %s20, %s27
      %p55 = scmp.eq.s32.totalorder %s54, 0
      %s57 = sadd.s32 %s56, 1
      %s58 = scalar_select %p55, %s56, %s57
      %p61 = pneg %p55
      %p62 = scmp.eq.s32.totalorder %s20, 1
      %p63 = por %p61, %p62
      %p64 = scmp.ne.s32.totalorder %s56, %s59
      %p65 = scmp.eq.s32.totalorder %s20, 0
      %p66 = por %p64, %p65
      %p67 = scmp.ne.s32.totalorder %s56, %s59
      %p68 = scmp.eq.s32.totalorder %s25, 1
      %p69 = por %p67, %p68
      %p70 = scmp.ne.s32.totalorder %s59, %s60
      %p71 = scmp.eq.s32.totalorder %s25, 0
      %p72 = por %p70, %p71
      %p73 = scmp.ne.s32.totalorder %s59, %s60
      %p74 = scmp.eq.s32.totalorder %s26, 1
      %p75 = por %p73, %p74
      %p77 = scmp.ne.s32.totalorder %s60, %s76
      %p78 = scmp.eq.s32.totalorder %s26, 0
      %p79 = por %p77, %p78
      %s81 = sadd.s32 %s80, 1
      %p84 = scmp.eq.s32.totalorder %s20, 1
      %p85 = scmp.ne.s32.totalorder %s80, %s82
      %p86 = scmp.eq.s32.totalorder %s20, 0
      %p87 = por %p85, %p86
      %p88 = scmp.ne.s32.totalorder %s80, %s82
      %p89 = scmp.eq.s32.totalorder %s25, 1
      %p90 = por %p88, %p89
      %p91 = scmp.ne.s32.totalorder %s82, %s83
      %p92 = scmp.eq.s32.totalorder %s25, 0
      %p93 = por %p91, %p92
      %p94 = scmp.ne.s32.totalorder %s82, %s83
      %p95 = scmp.eq.s32.totalorder %s26, 1
      %p96 = por %p94, %p95
      %p98 = scmp.ne.s32.totalorder %s83, %s97
      %p99 = scmp.eq.s32.totalorder %s26, 0
      %p100 = por %p98, %p99
      %s102 = sadd.s32 %s101, 1
      %p105 = scmp.eq.s32.totalorder %s20, 1
      %p106 = scmp.ne.s32.totalorder %s101, %s103
      %p107 = scmp.eq.s32.totalorder %s20, 0
      %p108 = por %p106, %p107
      %p109 = scmp.ne.s32.totalorder %s101, %s103
      %p110 = scmp.eq.s32.totalorder %s25, 1
      %p111 = por %p109, %p110
      %p112 = scmp.ne.s32.totalorder %s103, %s104
      %p113 = scmp.eq.s32.totalorder %s25, 0
      %p114 = por %p112, %p113
      %p115 = scmp.ne.s32.totalorder %s103, %s104
      %p116 = scmp.eq.s32.totalorder %s26, 1
      %p117 = por %p115, %p116
      %p119 = scmp.ne.s32.totalorder %s104, %s118
      %p120 = scmp.eq.s32.totalorder %s26, 0
      %p121 = por %p119, %p120
      %s122 = ssub.s32 %s20, %s27
      %p123 = scmp.eq.s32.totalorder %s122, 0
      %s125 = sadd.s32 %s124, 1
      %s126 = scalar_select %p123, %s124, %s125
      %p129 = pneg %p123
      %p130 = scmp.eq.s32.totalorder %s20, 1
      %p131 = por %p129, %p130
      %p132 = scmp.ne.s32.totalorder %s124, %s127
      %p133 = scmp.eq.s32.totalorder %s20, 0
      %p134 = por %p132, %p133
      %p135 = scmp.ne.s32.totalorder %s124, %s127
      %p136 = scmp.eq.s32.totalorder %s25, 1
      %p137 = por %p135, %p136
      %p138 = scmp.ne.s32.totalorder %s127, %s128
      %p139 = scmp.eq.s32.totalorder %s25, 0
      %p140 = por %p138, %p139
      %p141 = scmp.ne.s32.totalorder %s127, %s128
      %p142 = scmp.eq.s32.totalorder %s26, 1
      %p143 = por %p141, %p142
      %p145 = scmp.ne.s32.totalorder %s128, %s144
      %p146 = scmp.eq.s32.totalorder %s26, 0
      %p147 = por %p145, %p146
      %p148 = scmp.le.s32.totalorder 1, %s20
      %p149 = scmp.lt.s32.totalorder %s20, 3
      %p150 = pnand %p148, %p149
      %p151 = pneg %p150
      // Predicated region
      $region9: #{tpu_custom_call.1} parent=5 // pred_check
        _
      $region10: #{tpu_custom_call.1} parent=5 // pred_check_branch
        %153 = sbr.rel (%p150) target = $region12
      $region11: #{tpu_custom_call.1} parent=5 // pred_region
        %s154 = ssub.s32 %s20, 1
        // Predicated region
        $region13: #{tpu_custom_call.1} parent=11 // pred_check
          %p155 = pneg %p93
        $region14: #{tpu_custom_call.1} parent=11 // pred_check_branch
          %157 = sbr.rel (%p155) target = $region16
        $region15: #{tpu_custom_call.1} parent=11 // pred_region
          %159 = vsyncadd [#allocation8], 0
          %s160 = sshll.u32 %s2, 4
          %s161 = int_to_ptr.hbm [resolvable:$true] %s160
          %s162 = sshll.u32 [#allocation9], 4
          %s163 = int_to_ptr.vmem [resolvable:$true] %s162
          %168 = dma.hbm_to_vmem [thread:$0]  %s161, 256, %s163, [#allocation8], 128, 128, 8
        $region16: #{tpu_custom_call.1} parent=11 // pred_fallthru
          _
        // Predicated region
        $region17: #{tpu_custom_call.1} parent=11 // pred_check
          %p169 = pneg %p114
        $region18: #{tpu_custom_call.1} parent=11 // pred_check_branch
          %171 = sbr.rel (%p169) target = $region20
        $region19: #{tpu_custom_call.1} parent=11 // pred_region
          %173 = vsyncadd [#allocation11], 0
          %s175 = sshll.u32 %s3, 4
          %s176 = int_to_ptr.hbm [resolvable:$true] %s175
          %s177 = sshll.u32 [#allocation10], 4
          %s178 = int_to_ptr.vmem [resolvable:$true] %s177
          %180 = dma.hbm_to_vmem [thread:$0]  %s176, 128, %s178, [#allocation11]
        $region20: #{tpu_custom_call.1} parent=11 // pred_fallthru
          _
      $region12: #{tpu_custom_call.1} parent=5 // pred_fallthru
        _
      %p181 = scmp.lt.s32.totalorder %s20, 2
      // Predicated region
      $region21: #{tpu_custom_call.1} parent=5 // pred_check
        %p182 = pneg %p181
      $region22: #{tpu_custom_call.1} parent=5 // pred_check_branch
        %184 = sbr.rel (%p182) target = $region24
      $region23: #{tpu_custom_call.1} parent=5 // pred_region
        // Predicated region
        $region25: #{tpu_custom_call.1} parent=23 // pred_check
          %p185 = pneg %p40
        $region26: #{tpu_custom_call.1} parent=23 // pred_check_branch
          %187 = sbr.rel (%p185) target = $region28
        $region27: #{tpu_custom_call.1} parent=23 // pred_region
          %s188 = sand.u32 %s30, 1
          %s189 = scalar_lea.sflag [#allocation5], %s188
          %s190 = sand.u32 %s30, 1
          %s191 = smul.addr %s190, 48
          %s192 = scalar_lea.vmem [#allocation4], %s191
          %194 = vsyncadd %s189, 0
          %s195 = smul.addr %s20, 6
          %s196 = smul.addr %s195, 8
          %s197 = scalar_lea.hbm %s0, %s196
          %s198 = sshll.u32 %s197, 4
          %s199 = int_to_ptr.hbm [resolvable:$true] %s198
          %s200 = sshll.u32 %s192, 4
          %s201 = int_to_ptr.vmem [resolvable:$true] %s200
          %206 = dma.hbm_to_vmem [thread:$0]  %s199, 768, %s201, %s189, 128, 128, 8
        $region28: #{tpu_custom_call.1} parent=23 // pred_fallthru
          _
        // Predicated region
        $region29: #{tpu_custom_call.1} parent=23 // pred_check
          %p207 = pneg %p66
        $region30: #{tpu_custom_call.1} parent=23 // pred_check_branch
          %209 = sbr.rel (%p207) target = $region32
        $region31: #{tpu_custom_call.1} parent=23 // pred_region
          %s210 = sand.u32 %s20, 1
          %s211 = scalar_lea.sflag [#allocation8], %s210
          %s212 = sand.u32 %s56, 1
          %s213 = smul.addr %s212, 48
          %s214 = scalar_lea.vmem [#allocation7], %s213
          %216 = vsyncadd %s211, 0
          %s217 = smul.addr %s20, 6
          %s218 = smul.addr %s217, 8
          %s219 = scalar_lea.hbm %s1, %s218
          %s220 = sshll.u32 %s219, 4
          %s221 = int_to_ptr.hbm [resolvable:$true] %s220
          %s222 = sshll.u32 %s214, 4
          %s223 = int_to_ptr.vmem [resolvable:$true] %s222
          %228 = dma.hbm_to_vmem [thread:$0]  %s221, 768, %s223, %s211, 128, 128, 8
        $region32: #{tpu_custom_call.1} parent=23 // pred_fallthru
          _
      $region24: #{tpu_custom_call.1} parent=5 // pred_fallthru
        _
      %p229 = scmp.le.s32.totalorder 1, %s20
      %p230 = scmp.lt.s32.totalorder %s20, 3
      %p231 = pnand %p229, %p230
      %p232 = pneg %p231
      // Predicated region
      $region33: #{tpu_custom_call.1} parent=5 // pred_check
        _
      $region34: #{tpu_custom_call.1} parent=5 // pred_check_branch
        %234 = sbr.rel (%p231) target = $region36
      $region35: #{tpu_custom_call.1} parent=5 // pred_region
        %s235 = ssub.s32 %s20, 1
        %s236 = sand.u32 %s33, 1
        %s237 = scalar_lea.sflag [#allocation5], %s236
        %s238 = sand.u32 %s33, 1
        %s239 = smul.addr %s238, 48
        %s240 = scalar_lea.vmem [#allocation4], %s239
        // Predicated region
        $region37: #{tpu_custom_call.1} parent=35 // pred_check
          %p241 = pneg %p46
        $region38: #{tpu_custom_call.1} parent=35 // pred_check_branch
          %243 = sbr.rel (%p241) target = $region40
        $region39: #{tpu_custom_call.1} parent=35 // pred_region
          %245 = dma.done %s237, 768
        $region40: #{tpu_custom_call.1} parent=35 // pred_fallthru
          _
        %s246 = sand.u32 %s25, 1
        %s247 = scalar_lea.sflag [#allocation8], %s246
        %s248 = sand.u32 %s59, 1
        %s249 = smul.addr %s248, 48
        %s250 = scalar_lea.vmem [#allocation7], %s249
        // Predicated region
        $region41: #{tpu_custom_call.1} parent=35 // pred_check
          %p251 = pneg %p72
        $region42: #{tpu_custom_call.1} parent=35 // pred_check_branch
          %253 = sbr.rel (%p251) target = $region44
        $region43: #{tpu_custom_call.1} parent=35 // pred_region
          %255 = dma.done %s247, 768
        $region44: #{tpu_custom_call.1} parent=35 // pred_fallthru
          _
        // Predicated region
        $region45: #{tpu_custom_call.1} parent=35 // pred_check
          %p256 = pneg %p93
        $region46: #{tpu_custom_call.1} parent=35 // pred_check_branch
          %258 = sbr.rel (%p256) target = $region48
        $region47: #{tpu_custom_call.1} parent=35 // pred_region
          %260 = dma.done [#allocation8], 256
        $region48: #{tpu_custom_call.1} parent=35 // pred_fallthru
          _
        // Predicated region
        $region49: #{tpu_custom_call.1} parent=35 // pred_check
          %p261 = pneg %p114
        $region50: #{tpu_custom_call.1} parent=35 // pred_check_branch
          %263 = sbr.rel (%p261) target = $region52
        $region51: #{tpu_custom_call.1} parent=35 // pred_region
          %265 = dma.done [#allocation11], 128
        $region52: #{tpu_custom_call.1} parent=35 // pred_fallthru
          _
        %s266 = sand.u32 %s33, 1
        %s267 = scalar_lea.sflag [#allocation5], %s266
        %s268 = sand.u32 %s33, 1
        %s269 = smul.addr %s268, 48
        %s270 = scalar_lea.vmem [#allocation4], %s269
        %p271 = pneg %p46
        %p272 = pneg %p43
        %s273 = sand.u32 %s25, 1
        %s274 = scalar_lea.sflag [#allocation8], %s273
        %s275 = sand.u32 %s59, 1
        %s276 = smul.addr %s275, 48
        %s277 = scalar_lea.vmem [#allocation7], %s276
        %p278 = pneg %p72
        %p279 = pneg %p69
        %p280 = pneg %p93
        %p281 = pneg %p90
        %p282 = pneg %p114
        %p283 = pneg %p111
        %p284 = pneg %p140
        %p285 = pneg %p137
        %s286 = sand.u32 %s127, 1
        %s287 = scalar_lea.sflag [#allocation6], %s286
        %s288 = sand.u32 %s127, 1
        %s289 = smul.addr %s288, 8
        %s290 = scalar_lea.vmem [#allocation12], %s289
        %v291 = vld [vmem:[%s240] sm:$0xff]
        %v292 = vld [vmem:[%s240 + $0x8] sm:$0xff]
        %v293 = vld [vmem:[%s240 + $0x10] sm:$0xff]
        %v294 = vld [vmem:[%s240 + $0x18] sm:$0xff]
        %v295 = vld [vmem:[%s240 + $0x20] sm:$0xff]
        %v296 = vld [vmem:[%s240 + $0x28] sm:$0xff]
        %v297 = vld [vmem:[%s250] sm:$0xff]
        %v298 = vld [vmem:[%s250 + $0x8] sm:$0xff]
        %v299 = vld [vmem:[%s250 + $0x10] sm:$0xff]
        %v300 = vld [vmem:[%s250 + $0x18] sm:$0xff]
        %v301 = vld [vmem:[%s250 + $0x20] sm:$0xff]
        %v302 = vld [vmem:[%s250 + $0x28] sm:$0xff]
        %vm303 = vcmask 130048
        %304 = vst.msk [vmem:[#allocation2] sm:$0xff] %vm303, %v291
        %305 = vst.msk [vmem:[#allocation2 + $0x8] sm:$0xff] %vm303, %v292
        %306 = vst.msk [vmem:[#allocation2 + $0x10] sm:$0xff] %vm303, %v293
        %307 = vst.msk [vmem:[#allocation2 + $0x18] sm:$0xff] %vm303, %v294
        %308 = vst.msk [vmem:[#allocation2 + $0x20] sm:$0xff] %vm303, %v295
        %309 = vst.msk [vmem:[#allocation2 + $0x28] sm:$0xff] %vm303, %v296
        %310 = vst.msk [vmem:[#allocation2 + $0x30] sm:$0xff] %vm303, %v297
        %311 = vst.msk [vmem:[#allocation2 + $0x38] sm:$0xff] %vm303, %v298
        %312 = vst.msk [vmem:[#allocation2 + $0x40] sm:$0xff] %vm303, %v299
        %313 = vst.msk [vmem:[#allocation2 + $0x48] sm:$0xff] %vm303, %v300
        %314 = vst.msk [vmem:[#allocation2 + $0x50] sm:$0xff] %vm303, %v301
        %315 = vst.msk [vmem:[#allocation2 + $0x58] sm:$0xff] %vm303, %v302
        %v316 = vmul.f32 %v291, %v291
        %v317 = vmul.f32 %v292, %v292
        %v318 = vmul.f32 %v293, %v293
        %v319 = vmul.f32 %v294, %v294
        %v320 = vmul.f32 %v295, %v295
        %v321 = vmul.f32 %v296, %v296
        %322 = vst.msk [vmem:[#allocation2 + $0x60] sm:$0xff] %vm303, %v316
        %323 = vst.msk [vmem:[#allocation2 + $0x68] sm:$0xff] %vm303, %v317
        %324 = vst.msk [vmem:[#allocation2 + $0x70] sm:$0xff] %vm303, %v318
        %325 = vst.msk [vmem:[#allocation2 + $0x78] sm:$0xff] %vm303, %v319
        %326 = vst.msk [vmem:[#allocation2 + $0x80] sm:$0xff] %vm303, %v320
        %327 = vst.msk [vmem:[#allocation2 + $0x88] sm:$0xff] %vm303, %v321
        %v328 = vmul.f32 %v297, %v297
        %v329 = vmul.f32 %v298, %v298
        %v330 = vmul.f32 %v299, %v299
        %v331 = vmul.f32 %v300, %v300
        %v332 = vmul.f32 %v301, %v301
        %v333 = vmul.f32 %v302, %v302
        %334 = vst.msk [vmem:[#allocation2 + $0x90] sm:$0xff] %vm303, %v328
        %335 = vst.msk [vmem:[#allocation2 + $0x98] sm:$0xff] %vm303, %v329
        %336 = vst.msk [vmem:[#allocation2 + $0xa0] sm:$0xff] %vm303, %v330
        %337 = vst.msk [vmem:[#allocation2 + $0xa8] sm:$0xff] %vm303, %v331
        %338 = vst.msk [vmem:[#allocation2 + $0xb0] sm:$0xff] %vm303, %v332
        %339 = vst.msk [vmem:[#allocation2 + $0xb8] sm:$0xff] %vm303, %v333
        %v340 = vmul.f32 %v291, %v297
        %v341 = vmul.f32 %v292, %v298
        %v342 = vmul.f32 %v293, %v299
        %v343 = vmul.f32 %v294, %v300
        %v344 = vmul.f32 %v295, %v301
        %v345 = vmul.f32 %v296, %v302
        %346 = vst.msk [vmem:[#allocation2 + $0xc0] sm:$0xff] %vm303, %v340
        %347 = vst.msk [vmem:[#allocation2 + $0xc8] sm:$0xff] %vm303, %v341
        %348 = vst.msk [vmem:[#allocation2 + $0xd0] sm:$0xff] %vm303, %v342
        %349 = vst.msk [vmem:[#allocation2 + $0xd8] sm:$0xff] %vm303, %v343
        %350 = vst.msk [vmem:[#allocation2 + $0xe0] sm:$0xff] %vm303, %v344
        %351 = vst.msk [vmem:[#allocation2 + $0xe8] sm:$0xff] %vm303, %v345
        %v352 = vld [vmem:[#allocation2] sm:$0xff]
        %v353 = vld [vmem:[#allocation2 + $0x8] sm:$0xff]
        %v354 = vld [vmem:[#allocation2 + $0x10] sm:$0xff]
        %v355 = vld [vmem:[#allocation2 + $0x18] sm:$0xff]
        %v356 = vld [vmem:[#allocation2 + $0x20] sm:$0xff]
        %v357 = vld [vmem:[#allocation2 + $0x28] sm:$0xff]
        %v358 = vld [vmem:[#allocation2 + $0x30] sm:$0xff]
        %v359 = vld [vmem:[#allocation2 + $0x38] sm:$0xff]
        %v360 = vld [vmem:[#allocation2 + $0x40] sm:$0xff]
        %v361 = vld [vmem:[#allocation2 + $0x48] sm:$0xff]
        %v362 = vld [vmem:[#allocation2 + $0x50] sm:$0xff]
        %v363 = vld [vmem:[#allocation2 + $0x58] sm:$0xff]
        %v364 = vld [vmem:[#allocation2 + $0x60] sm:$0xff]
        %v365 = vld [vmem:[#allocation2 + $0x68] sm:$0xff]
        %v366 = vld [vmem:[#allocation2 + $0x70] sm:$0xff]
        %v367 = vld [vmem:[#allocation2 + $0x78] sm:$0xff]
        %v368 = vld [vmem:[#allocation2 + $0x80] sm:$0xff]
        %v369 = vld [vmem:[#allocation2 + $0x88] sm:$0xff]
        %v370 = vld [vmem:[#allocation2 + $0x90] sm:$0xff]
        %v371 = vld [vmem:[#allocation2 + $0x98] sm:$0xff]
        %v372 = vld [vmem:[#allocation2 + $0xa0] sm:$0xff]
        %v373 = vld [vmem:[#allocation2 + $0xa8] sm:$0xff]
        %v374 = vld [vmem:[#allocation2 + $0xb0] sm:$0xff]
        %v375 = vld [vmem:[#allocation2 + $0xb8] sm:$0xff]
        %v376 = vld [vmem:[#allocation2 + $0xc0] sm:$0xff]
        %v377 = vld [vmem:[#allocation2 + $0xc8] sm:$0xff]
        %v378 = vld [vmem:[#allocation2 + $0xd0] sm:$0xff]
        %v379 = vld [vmem:[#allocation2 + $0xd8] sm:$0xff]
        %v380 = vld [vmem:[#allocation2 + $0xe0] sm:$0xff]
        %v381 = vld [vmem:[#allocation2 + $0xe8] sm:$0xff]
        %v382 = vld [vmem:[#allocation9] sm:$0xff]
        %v383 = vld [vmem:[#allocation9 + $0x8] sm:$0xff]
        %v385 = vsel %vm303, %v352, 0
        %v388 = vsel %vm303, %v353, 0
        %v391 = vsel %vm303, %v354, 0
        %v394 = vsel %vm303, %v355, 0
        %v397 = vsel %vm303, %v356, 0
        %v400 = vsel %vm303, %v357, 0
        %v403 = vsel %vm303, %v358, 0
        %v406 = vsel %vm303, %v359, 0
        %v409 = vsel %vm303, %v360, 0
        %v412 = vsel %vm303, %v361, 0
        %v415 = vsel %vm303, %v362, 0
        %v418 = vsel %vm303, %v363, 0
        %v421 = vsel %vm303, %v364, 0
        %v424 = vsel %vm303, %v365, 0
        %v427 = vsel %vm303, %v366, 0
        %v430 = vsel %vm303, %v367, 0
        %v433 = vsel %vm303, %v368, 0
        %v436 = vsel %vm303, %v369, 0
        %v439 = vsel %vm303, %v370, 0
        %v442 = vsel %vm303, %v371, 0
        %v445 = vsel %vm303, %v372, 0
        %v448 = vsel %vm303, %v373, 0
        %v451 = vsel %vm303, %v374, 0
        %v454 = vsel %vm303, %v375, 0
        %v457 = vsel %vm303, %v376, 0
        %v460 = vsel %vm303, %v377, 0
        %v463 = vsel %vm303, %v378, 0
        %v466 = vsel %vm303, %v379, 0
        %v469 = vsel %vm303, %v380, 0
        %v472 = vsel %vm303, %v381, 0
        %474 = vmatpush.msra.mxu0 0.0
        %475 = vmatpush.msra.mxu0 0.0
        %476 = vmatpush.msra.mxu0 0.0
        %477 = vmatpush.msra.mxu0 0.0
        %478 = vmatpush.msra.mxu0 0.0
        %479 = vmatpush.msra.mxu0 0.0
        %480 = vmatpush.msra.mxu0 0.0
        %481 = vmatpush.msra.mxu0 0.0
        %482 = vmatpush.msra.mxu0 0.0
        %483 = vmatpush.msra.mxu0 0.0
        %484 = vmatpush.msra.mxu0 0.0
        %485 = vmatpush.msra.mxu0 0.0
        %486 = vmatpush.msra.mxu0 0.0
        %487 = vmatpush.msra.mxu0 0.0
        %488 = vmatpush.msra.mxu0 %v383
        %489 = vmatpush.msra.mxu0 %v382
        %490 = vmatmul.f32.gmra.mxu0 %v385
        %v491 = vpop.f32.mrf.mxu0
        %v492 = vadd.f32 0.0, %v491
        %493 = vmatmul.f32.gmra.mxu0 %v388
        %v494 = vpop.f32.mrf.mxu0
        %v495 = vadd.f32 0.0, %v494
        %496 = vmatmul.f32.gmra.mxu0 %v391
        %v497 = vpop.f32.mrf.mxu0
        %v498 = vadd.f32 0.0, %v497
        %499 = vmatmul.f32.gmra.mxu0 %v394
        %v500 = vpop.f32.mrf.mxu0
        %v501 = vadd.f32 0.0, %v500
        %502 = vmatmul.f32.gmra.mxu0 %v397
        %v503 = vpop.f32.mrf.mxu0
        %v504 = vadd.f32 0.0, %v503
        %505 = vmatmul.f32.gmra.mxu0 %v400
        %v506 = vpop.f32.mrf.mxu0
        %v507 = vadd.f32 0.0, %v506
        %508 = vmatmul.f32.gmra.mxu0 %v403
        %v509 = vpop.f32.mrf.mxu0
        %v510 = vadd.f32 0.0, %v509
        %511 = vmatmul.f32.gmra.mxu0 %v406
        %v512 = vpop.f32.mrf.mxu0
        %v513 = vadd.f32 0.0, %v512
        %514 = vmatmul.f32.gmra.mxu0 %v409
        %v515 = vpop.f32.mrf.mxu0
        %v516 = vadd.f32 0.0, %v515
        %517 = vmatmul.f32.gmra.mxu0 %v412
        %v518 = vpop.f32.mrf.mxu0
        %v519 = vadd.f32 0.0, %v518
        %520 = vmatmul.f32.gmra.mxu0 %v415
        %v521 = vpop.f32.mrf.mxu0
        %v522 = vadd.f32 0.0, %v521
        %523 = vmatmul.f32.gmra.mxu0 %v418
        %v524 = vpop.f32.mrf.mxu0
        %v525 = vadd.f32 0.0, %v524
        %526 = vmatmul.f32.gmra.mxu0 %v421
        %v527 = vpop.f32.mrf.mxu0
        %v528 = vadd.f32 0.0, %v527
        %529 = vmatmul.f32.gmra.mxu0 %v424
        %v530 = vpop.f32.mrf.mxu0
        %v531 = vadd.f32 0.0, %v530
        %532 = vmatmul.f32.gmra.mxu0 %v427
        %v533 = vpop.f32.mrf.mxu0
        %v534 = vadd.f32 0.0, %v533
        %535 = vmatmul.f32.gmra.mxu0 %v430
        %v536 = vpop.f32.mrf.mxu0
        %v537 = vadd.f32 0.0, %v536
        %538 = vmatmul.f32.gmra.mxu0 %v433
        %v539 = vpop.f32.mrf.mxu0
        %v540 = vadd.f32 0.0, %v539
        %541 = vmatmul.f32.gmra.mxu0 %v436
        %v542 = vpop.f32.mrf.mxu0
        %v543 = vadd.f32 0.0, %v542
        %544 = vmatmul.f32.gmra.mxu0 %v439
        %v545 = vpop.f32.mrf.mxu0
        %v546 = vadd.f32 0.0, %v545
        %547 = vmatmul.f32.gmra.mxu0 %v442
        %v548 = vpop.f32.mrf.mxu0
        %v549 = vadd.f32 0.0, %v548
        %550 = vmatmul.f32.gmra.mxu0 %v445
        %v551 = vpop.f32.mrf.mxu0
        %v552 = vadd.f32 0.0, %v551
        %553 = vmatmul.f32.gmra.mxu0 %v448
        %v554 = vpop.f32.mrf.mxu0
        %v555 = vadd.f32 0.0, %v554
        %556 = vmatmul.f32.gmra.mxu0 %v451
        %v557 = vpop.f32.mrf.mxu0
        %v558 = vadd.f32 0.0, %v557
        %559 = vmatmul.f32.gmra.mxu0 %v454
        %v560 = vpop.f32.mrf.mxu0
        %v561 = vadd.f32 0.0, %v560
        %562 = vmatmul.f32.gmra.mxu0 %v457
        %v563 = vpop.f32.mrf.mxu0
        %v564 = vadd.f32 0.0, %v563
        %565 = vmatmul.f32.gmra.mxu0 %v460
        %v566 = vpop.f32.mrf.mxu0
        %v567 = vadd.f32 0.0, %v566
        %568 = vmatmul.f32.gmra.mxu0 %v463
        %v569 = vpop.f32.mrf.mxu0
        %v570 = vadd.f32 0.0, %v569
        %571 = vmatmul.f32.gmra.mxu0 %v466
        %v572 = vpop.f32.mrf.mxu0
        %v573 = vadd.f32 0.0, %v572
        %574 = vmatmul.f32.gmra.mxu0 %v469
        %v575 = vpop.f32.mrf.mxu0
        %v576 = vadd.f32 0.0, %v575
        %577 = vmatmul.f32.gmra.mxu0 %v472
        %v578 = vpop.f32.mrf.mxu0
        %v579 = vadd.f32 0.0, %v578
        %580 = vdwg.mxu0
        %581 = vst [vmem:[#allocation3] sm:$0xff] %v492
        %582 = vst [vmem:[#allocation3 + $0x78] sm:$0xff] %v495
        %583 = vst [vmem:[#allocation3 + $0x8] sm:$0xff] %v498
        %584 = vst [vmem:[#allocation3 + $0x80] sm:$0xff] %v501
        %585 = vst [vmem:[#allocation3 + $0x10] sm:$0xff] %v504
        %586 = vst [vmem:[#allocation3 + $0x88] sm:$0xff] %v507
        %587 = vst [vmem:[#allocation3 + $0x18] sm:$0xff] %v510
        %588 = vst [vmem:[#allocation3 + $0x90] sm:$0xff] %v513
        %589 = vst [vmem:[#allocation3 + $0x20] sm:$0xff] %v516
        %590 = vst [vmem:[#allocation3 + $0x98] sm:$0xff] %v519
        %591 = vst [vmem:[#allocation3 + $0x28] sm:$0xff] %v522
        %592 = vst [vmem:[#allocation3 + $0xa0] sm:$0xff] %v525
        %593 = vst [vmem:[#allocation3 + $0x30] sm:$0xff] %v528
        %594 = vst [vmem:[#allocation3 + $0xa8] sm:$0xff] %v531
        %595 = vst [vmem:[#allocation3 + $0x38] sm:$0xff] %v534
        %596 = vst [vmem:[#allocation3 + $0xb0] sm:$0xff] %v537
        %597 = vst [vmem:[#allocation3 + $0x40] sm:$0xff] %v540
        %598 = vst [vmem:[#allocation3 + $0xb8] sm:$0xff] %v543
        %599 = vst [vmem:[#allocation3 + $0x48] sm:$0xff] %v546
        %600 = vst [vmem:[#allocation3 + $0xc0] sm:$0xff] %v549
        %601 = vst [vmem:[#allocation3 + $0x50] sm:$0xff] %v552
        %602 = vst [vmem:[#allocation3 + $0xc8] sm:$0xff] %v555
        %603 = vst [vmem:[#allocation3 + $0x58] sm:$0xff] %v558
        %604 = vst [vmem:[#allocation3 + $0xd0] sm:$0xff] %v561
        %605 = vst [vmem:[#allocation3 + $0x60] sm:$0xff] %v564
        %606 = vst [vmem:[#allocation3 + $0xd8] sm:$0xff] %v567
        %607 = vst [vmem:[#allocation3 + $0x68] sm:$0xff] %v570
        %608 = vst [vmem:[#allocation3 + $0xe0] sm:$0xff] %v573
        %609 = vst [vmem:[#allocation3 + $0x70] sm:$0xff] %v576
        %610 = vst [vmem:[#allocation3 + $0xe8] sm:$0xff] %v579
        %v611 = vld [vmem:[#allocation10] sm:$0xff]
        %v612 = vld [vmem:[#allocation3] sm:$0xff]
        %v613 = vld [vmem:[#allocation3 + $0x8] sm:$0xff]
        %v614 = vld [vmem:[#allocation3 + $0x10] sm:$0xff]
        %v615 = vld [vmem:[#allocation3 + $0x18] sm:$0xff]
        %v616 = vld [vmem:[#allocation3 + $0x20] sm:$0xff]
        %v617 = vld [vmem:[#allocation3 + $0x28] sm:$0xff]
        %v618 = vld [vmem:[#allocation3 + $0x30] sm:$0xff]
        %v619 = vld [vmem:[#allocation3 + $0x38] sm:$0xff]
        %v620 = vld [vmem:[#allocation3 + $0x40] sm:$0xff]
        %v621 = vld [vmem:[#allocation3 + $0x48] sm:$0xff]
        %v622 = vld [vmem:[#allocation3 + $0x50] sm:$0xff]
        %v623 = vld [vmem:[#allocation3 + $0x58] sm:$0xff]
        %v624 = vld [vmem:[#allocation3 + $0x60] sm:$0xff]
        %v625 = vld [vmem:[#allocation3 + $0x68] sm:$0xff]
        %v626 = vld [vmem:[#allocation3 + $0x70] sm:$0xff]
        %v627 = vld [vmem:[#allocation3 + $0x78] sm:$0xff]
        %v628 = vld [vmem:[#allocation3 + $0x80] sm:$0xff]
        %v629 = vld [vmem:[#allocation3 + $0x88] sm:$0xff]
        %v630 = vld [vmem:[#allocation3 + $0x90] sm:$0xff]
        %v631 = vld [vmem:[#allocation3 + $0x98] sm:$0xff]
        %v632 = vld [vmem:[#allocation3 + $0xa0] sm:$0xff]
        %v633 = vld [vmem:[#allocation3 + $0xa8] sm:$0xff]
        %v634 = vld [vmem:[#allocation3 + $0xb0] sm:$0xff]
        %v635 = vld [vmem:[#allocation3 + $0xb8] sm:$0xff]
        %v636 = vld [vmem:[#allocation3 + $0xc0] sm:$0xff]
        %v637 = vld [vmem:[#allocation3 + $0xc8] sm:$0xff]
        %v638 = vld [vmem:[#allocation3 + $0xd0] sm:$0xff]
        %v639 = vld [vmem:[#allocation3 + $0xd8] sm:$0xff]
        %v640 = vld [vmem:[#allocation3 + $0xe0] sm:$0xff]
        %v641 = vld [vmem:[#allocation3 + $0xe8] sm:$0xff]
        %v643 = vsel %vm303, %v611, 0
        %645 = vmatpush.msra.mxu0 0.0
        %646 = vmatpush.msra.mxu0 0.0
        %647 = vmatpush.msra.mxu0 0.0
        %648 = vmatpush.msra.mxu0 0.0
        %649 = vmatpush.msra.mxu0 0.0
        %650 = vmatpush.msra.mxu0 0.0
        %651 = vmatpush.msra.mxu0 0.0
        %652 = vmatpush.msra.mxu0 0.0
        %653 = vmatpush.msra.mxu0 0.0
        %654 = vmatpush.msra.mxu0 0.0
        %655 = vmatpush.msra.mxu0 0.0
        %656 = vmatpush.msra.mxu0 0.0
        %657 = vmatpush.msra.mxu0 0.0
        %658 = vmatpush.msra.mxu0 0.0
        %659 = vmatpush.msra.mxu0 %v627
        %660 = vmatpush.msra.mxu0 %v612
        %661 = vmatmul.f32.gmra.mxu0 %v643
        %v662 = vpop.f32.mrf.mxu0
        %v663 = vadd.f32 0.0, %v662
        %664 = vdwg.mxu0
        %665 = vmatpush.msra.mxu0 0.0
        %666 = vmatpush.msra.mxu0 0.0
        %667 = vmatpush.msra.mxu0 0.0
        %668 = vmatpush.msra.mxu0 0.0
        %669 = vmatpush.msra.mxu0 0.0
        %670 = vmatpush.msra.mxu0 0.0
        %671 = vmatpush.msra.mxu0 0.0
        %672 = vmatpush.msra.mxu0 0.0
        %673 = vmatpush.msra.mxu0 0.0
        %674 = vmatpush.msra.mxu0 0.0
        %675 = vmatpush.msra.mxu0 0.0
        %676 = vmatpush.msra.mxu0 0.0
        %677 = vmatpush.msra.mxu0 0.0
        %678 = vmatpush.msra.mxu0 0.0
        %679 = vmatpush.msra.mxu0 %v628
        %680 = vmatpush.msra.mxu0 %v613
        %681 = vmatmul.f32.gmra.mxu0 %v643
        %v682 = vpop.f32.mrf.mxu0
        %v683 = vadd.f32 0.0, %v682
        %684 = vdwg.mxu0
        %685 = vmatpush.msra.mxu0 0.0
        %686 = vmatpush.msra.mxu0 0.0
        %687 = vmatpush.msra.mxu0 0.0
        %688 = vmatpush.msra.mxu0 0.0
        %689 = vmatpush.msra.mxu0 0.0
        %690 = vmatpush.msra.mxu0 0.0
        %691 = vmatpush.msra.mxu0 0.0
        %692 = vmatpush.msra.mxu0 0.0
        %693 = vmatpush.msra.mxu0 0.0
        %694 = vmatpush.msra.mxu0 0.0
        %695 = vmatpush.msra.mxu0 0.0
        %696 = vmatpush.msra.mxu0 0.0
        %697 = vmatpush.msra.mxu0 0.0
        %698 = vmatpush.msra.mxu0 0.0
        %699 = vmatpush.msra.mxu0 %v629
        %700 = vmatpush.msra.mxu0 %v614
        %701 = vmatmul.f32.gmra.mxu0 %v643
        %v702 = vpop.f32.mrf.mxu0
        %v703 = vadd.f32 0.0, %v702
        %704 = vdwg.mxu0
        %705 = vmatpush.msra.mxu0 0.0
        %706 = vmatpush.msra.mxu0 0.0
        %707 = vmatpush.msra.mxu0 0.0
        %708 = vmatpush.msra.mxu0 0.0
        %709 = vmatpush.msra.mxu0 0.0
        %710 = vmatpush.msra.mxu0 0.0
        %711 = vmatpush.msra.mxu0 0.0
        %712 = vmatpush.msra.mxu0 0.0
        %713 = vmatpush.msra.mxu0 0.0
        %714 = vmatpush.msra.mxu0 0.0
        %715 = vmatpush.msra.mxu0 0.0
        %716 = vmatpush.msra.mxu0 0.0
        %717 = vmatpush.msra.mxu0 0.0
        %718 = vmatpush.msra.mxu0 0.0
        %719 = vmatpush.msra.mxu0 %v630
        %720 = vmatpush.msra.mxu0 %v615
        %721 = vmatmul.f32.gmra.mxu0 %v643
        %v722 = vpop.f32.mrf.mxu0
        %v723 = vadd.f32 0.0, %v722
        %724 = vdwg.mxu0
        %725 = vmatpush.msra.mxu0 0.0
        %726 = vmatpush.msra.mxu0 0.0
        %727 = vmatpush.msra.mxu0 0.0
        %728 = vmatpush.msra.mxu0 0.0
        %729 = vmatpush.msra.mxu0 0.0
        %730 = vmatpush.msra.mxu0 0.0
        %731 = vmatpush.msra.mxu0 0.0
        %732 = vmatpush.msra.mxu0 0.0
        %733 = vmatpush.msra.mxu0 0.0
        %734 = vmatpush.msra.mxu0 0.0
        %735 = vmatpush.msra.mxu0 0.0
        %736 = vmatpush.msra.mxu0 0.0
        %737 = vmatpush.msra.mxu0 0.0
        %738 = vmatpush.msra.mxu0 0.0
        %739 = vmatpush.msra.mxu0 %v631
        %740 = vmatpush.msra.mxu0 %v616
        %741 = vmatmul.f32.gmra.mxu0 %v643
        %v742 = vpop.f32.mrf.mxu0
        %v743 = vadd.f32 0.0, %v742
        %744 = vdwg.mxu0
        %745 = vmatpush.msra.mxu0 0.0
        %746 = vmatpush.msra.mxu0 0.0
        %747 = vmatpush.msra.mxu0 0.0
        %748 = vmatpush.msra.mxu0 0.0
        %749 = vmatpush.msra.mxu0 0.0
        %750 = vmatpush.msra.mxu0 0.0
        %751 = vmatpush.msra.mxu0 0.0
        %752 = vmatpush.msra.mxu0 0.0
        %753 = vmatpush.msra.mxu0 0.0
        %754 = vmatpush.msra.mxu0 0.0
        %755 = vmatpush.msra.mxu0 0.0
        %756 = vmatpush.msra.mxu0 0.0
        %757 = vmatpush.msra.mxu0 0.0
        %758 = vmatpush.msra.mxu0 0.0
        %759 = vmatpush.msra.mxu0 %v632
        %760 = vmatpush.msra.mxu0 %v617
        %761 = vmatmul.f32.gmra.mxu0 %v643
        %v762 = vpop.f32.mrf.mxu0
        %v763 = vadd.f32 0.0, %v762
        %764 = vdwg.mxu0
        %765 = vmatpush.msra.mxu0 0.0
        %766 = vmatpush.msra.mxu0 0.0
        %767 = vmatpush.msra.mxu0 0.0
        %768 = vmatpush.msra.mxu0 0.0
        %769 = vmatpush.msra.mxu0 0.0
        %770 = vmatpush.msra.mxu0 0.0
        %771 = vmatpush.msra.mxu0 0.0
        %772 = vmatpush.msra.mxu0 0.0
        %773 = vmatpush.msra.mxu0 0.0
        %774 = vmatpush.msra.mxu0 0.0
        %775 = vmatpush.msra.mxu0 0.0
        %776 = vmatpush.msra.mxu0 0.0
        %777 = vmatpush.msra.mxu0 0.0
        %778 = vmatpush.msra.mxu0 0.0
        %779 = vmatpush.msra.mxu0 %v633
        %780 = vmatpush.msra.mxu0 %v618
        %781 = vmatmul.f32.gmra.mxu0 %v643
        %v782 = vpop.f32.mrf.mxu0
        %v783 = vadd.f32 0.0, %v782
        %784 = vdwg.mxu0
        %785 = vmatpush.msra.mxu0 0.0
        %786 = vmatpush.msra.mxu0 0.0
        %787 = vmatpush.msra.mxu0 0.0
        %788 = vmatpush.msra.mxu0 0.0
        %789 = vmatpush.msra.mxu0 0.0
        %790 = vmatpush.msra.mxu0 0.0
        %791 = vmatpush.msra.mxu0 0.0
        %792 = vmatpush.msra.mxu0 0.0
        %793 = vmatpush.msra.mxu0 0.0
        %794 = vmatpush.msra.mxu0 0.0
        %795 = vmatpush.msra.mxu0 0.0
        %796 = vmatpush.msra.mxu0 0.0
        %797 = vmatpush.msra.mxu0 0.0
        %798 = vmatpush.msra.mxu0 0.0
        %799 = vmatpush.msra.mxu0 %v634
        %800 = vmatpush.msra.mxu0 %v619
        %801 = vmatmul.f32.gmra.mxu0 %v643
        %v802 = vpop.f32.mrf.mxu0
        %v803 = vadd.f32 0.0, %v802
        %804 = vdwg.mxu0
        %805 = vmatpush.msra.mxu0 0.0
        %806 = vmatpush.msra.mxu0 0.0
        %807 = vmatpush.msra.mxu0 0.0
        %808 = vmatpush.msra.mxu0 0.0
        %809 = vmatpush.msra.mxu0 0.0
        %810 = vmatpush.msra.mxu0 0.0
        %811 = vmatpush.msra.mxu0 0.0
        %812 = vmatpush.msra.mxu0 0.0
        %813 = vmatpush.msra.mxu0 0.0
        %814 = vmatpush.msra.mxu0 0.0
        %815 = vmatpush.msra.mxu0 0.0
        %816 = vmatpush.msra.mxu0 0.0
        %817 = vmatpush.msra.mxu0 0.0
        %818 = vmatpush.msra.mxu0 0.0
        %819 = vmatpush.msra.mxu0 %v635
        %820 = vmatpush.msra.mxu0 %v620
        %821 = vmatmul.f32.gmra.mxu0 %v643
        %v822 = vpop.f32.mrf.mxu0
        %v823 = vadd.f32 0.0, %v822
        %824 = vdwg.mxu0
        %825 = vmatpush.msra.mxu0 0.0
        %826 = vmatpush.msra.mxu0 0.0
        %827 = vmatpush.msra.mxu0 0.0
        %828 = vmatpush.msra.mxu0 0.0
        %829 = vmatpush.msra.mxu0 0.0
        %830 = vmatpush.msra.mxu0 0.0
        %831 = vmatpush.msra.mxu0 0.0
        %832 = vmatpush.msra.mxu0 0.0
        %833 = vmatpush.msra.mxu0 0.0
        %834 = vmatpush.msra.mxu0 0.0
        %835 = vmatpush.msra.mxu0 0.0
        %836 = vmatpush.msra.mxu0 0.0
        %837 = vmatpush.msra.mxu0 0.0
        %838 = vmatpush.msra.mxu0 0.0
        %839 = vmatpush.msra.mxu0 %v636
        %840 = vmatpush.msra.mxu0 %v621
        %841 = vmatmul.f32.gmra.mxu0 %v643
        %v842 = vpop.f32.mrf.mxu0
        %v843 = vadd.f32 0.0, %v842
        %844 = vdwg.mxu0
        %845 = vmatpush.msra.mxu0 0.0
        %846 = vmatpush.msra.mxu0 0.0
        %847 = vmatpush.msra.mxu0 0.0
        %848 = vmatpush.msra.mxu0 0.0
        %849 = vmatpush.msra.mxu0 0.0
        %850 = vmatpush.msra.mxu0 0.0
        %851 = vmatpush.msra.mxu0 0.0
        %852 = vmatpush.msra.mxu0 0.0
        %853 = vmatpush.msra.mxu0 0.0
        %854 = vmatpush.msra.mxu0 0.0
        %855 = vmatpush.msra.mxu0 0.0
        %856 = vmatpush.msra.mxu0 0.0
        %857 = vmatpush.msra.mxu0 0.0
        %858 = vmatpush.msra.mxu0 0.0
        %859 = vmatpush.msra.mxu0 %v637
        %860 = vmatpush.msra.mxu0 %v622
        %861 = vmatmul.f32.gmra.mxu0 %v643
        %v862 = vpop.f32.mrf.mxu0
        %v863 = vadd.f32 0.0, %v862
        %864 = vdwg.mxu0
        %865 = vmatpush.msra.mxu0 0.0
        %866 = vmatpush.msra.mxu0 0.0
        %867 = vmatpush.msra.mxu0 0.0
        %868 = vmatpush.msra.mxu0 0.0
        %869 = vmatpush.msra.mxu0 0.0
        %870 = vmatpush.msra.mxu0 0.0
        %871 = vmatpush.msra.mxu0 0.0
        %872 = vmatpush.msra.mxu0 0.0
        %873 = vmatpush.msra.mxu0 0.0
        %874 = vmatpush.msra.mxu0 0.0
        %875 = vmatpush.msra.mxu0 0.0
        %876 = vmatpush.msra.mxu0 0.0
        %877 = vmatpush.msra.mxu0 0.0
        %878 = vmatpush.msra.mxu0 0.0
        %879 = vmatpush.msra.mxu0 %v638
        %880 = vmatpush.msra.mxu0 %v623
        %881 = vmatmul.f32.gmra.mxu0 %v643
        %v882 = vpop.f32.mrf.mxu0
        %v883 = vadd.f32 0.0, %v882
        %884 = vdwg.mxu0
        %885 = vmatpush.msra.mxu0 0.0
        %886 = vmatpush.msra.mxu0 0.0
        %887 = vmatpush.msra.mxu0 0.0
        %888 = vmatpush.msra.mxu0 0.0
        %889 = vmatpush.msra.mxu0 0.0
        %890 = vmatpush.msra.mxu0 0.0
        %891 = vmatpush.msra.mxu0 0.0
        %892 = vmatpush.msra.mxu0 0.0
        %893 = vmatpush.msra.mxu0 0.0
        %894 = vmatpush.msra.mxu0 0.0
        %895 = vmatpush.msra.mxu0 0.0
        %896 = vmatpush.msra.mxu0 0.0
        %897 = vmatpush.msra.mxu0 0.0
        %898 = vmatpush.msra.mxu0 0.0
        %899 = vmatpush.msra.mxu0 %v639
        %900 = vmatpush.msra.mxu0 %v624
        %901 = vmatmul.f32.gmra.mxu0 %v643
        %v902 = vpop.f32.mrf.mxu0
        %v903 = vadd.f32 0.0, %v902
        %904 = vdwg.mxu0
        %905 = vmatpush.msra.mxu0 0.0
        %906 = vmatpush.msra.mxu0 0.0
        %907 = vmatpush.msra.mxu0 0.0
        %908 = vmatpush.msra.mxu0 0.0
        %909 = vmatpush.msra.mxu0 0.0
        %910 = vmatpush.msra.mxu0 0.0
        %911 = vmatpush.msra.mxu0 0.0
        %912 = vmatpush.msra.mxu0 0.0
        %913 = vmatpush.msra.mxu0 0.0
        %914 = vmatpush.msra.mxu0 0.0
        %915 = vmatpush.msra.mxu0 0.0
        %916 = vmatpush.msra.mxu0 0.0
        %917 = vmatpush.msra.mxu0 0.0
        %918 = vmatpush.msra.mxu0 0.0
        %919 = vmatpush.msra.mxu0 %v640
        %920 = vmatpush.msra.mxu0 %v625
        %921 = vmatmul.f32.gmra.mxu0 %v643
        %v922 = vpop.f32.mrf.mxu0
        %v923 = vadd.f32 0.0, %v922
        %924 = vdwg.mxu0
        %925 = vmatpush.msra.mxu0 0.0
        %926 = vmatpush.msra.mxu0 0.0
        %927 = vmatpush.msra.mxu0 0.0
        %928 = vmatpush.msra.mxu0 0.0
        %929 = vmatpush.msra.mxu0 0.0
        %930 = vmatpush.msra.mxu0 0.0
        %931 = vmatpush.msra.mxu0 0.0
        %932 = vmatpush.msra.mxu0 0.0
        %933 = vmatpush.msra.mxu0 0.0
        %934 = vmatpush.msra.mxu0 0.0
        %935 = vmatpush.msra.mxu0 0.0
        %936 = vmatpush.msra.mxu0 0.0
        %937 = vmatpush.msra.mxu0 0.0
        %938 = vmatpush.msra.mxu0 0.0
        %939 = vmatpush.msra.mxu0 %v641
        %940 = vmatpush.msra.mxu0 %v626
        %941 = vmatmul.f32.gmra.mxu0 %v643
        %v942 = vpop.f32.mrf.mxu0
        %v943 = vadd.f32 0.0, %v942
        %944 = vdwg.mxu0
        %v945 = vmul.f32 %v663, %v663
        %v946 = vmul.f32 %v683, %v683
        %v947 = vmul.f32 %v703, %v703
        %v948 = vmul.f32 %v723, %v723
        %v949 = vmul.f32 %v743, %v743
        %v950 = vmul.f32 %v763, %v763
        %v951 = vmul.f32 %v663, %v723
        %v952 = vmul.f32 %v683, %v743
        %v953 = vmul.f32 %v703, %v763
        %v954 = vsub.f32 %v783, %v945
        %v955 = vsub.f32 %v803, %v946
        %v956 = vsub.f32 %v823, %v947
        %v957 = vsub.f32 %v843, %v948
        %v958 = vsub.f32 %v863, %v949
        %v959 = vsub.f32 %v883, %v950
        %v960 = vsub.f32 %v903, %v951
        %v961 = vsub.f32 %v923, %v952
        %v962 = vsub.f32 %v943, %v953
        %v963 = vmul.f32 %v960, 2.0
        %v964 = vmul.f32 %v961, 2.0
        %v965 = vmul.f32 %v962, 2.0
        %v966 = vadd.f32 %v963, 58.5225
        %v967 = vadd.f32 %v964, 58.5225
        %v968 = vadd.f32 %v965, 58.5225
        %v969 = vadd.f32 %v954, %v957
        %v970 = vadd.f32 %v955, %v958
        %v971 = vadd.f32 %v956, %v959
        %v972 = vadd.f32 %v969, 58.5225
        %v973 = vadd.f32 %v970, 58.5225
        %v974 = vadd.f32 %v971, 58.5225
        %v975 = vrcp.pop %v972
        %v976 = vrcp.pop %v973
        %v977 = vrcp.pop %v974
        %v978 = vmul.f32 %v972, %v975
        %v979 = vmul.f32 %v973, %v976
        %v980 = vmul.f32 %v974, %v977
        %v981 = vsub.f32 2.0, %v978
        %v982 = vsub.f32 2.0, %v979
        %v983 = vsub.f32 2.0, %v980
        %v984 = vmul.f32 %v975, %v981
        %v985 = vmul.f32 %v976, %v982
        %v986 = vmul.f32 %v977, %v983
        %v987 = vmul.f32 %v966, %v984
        %v988 = vmul.f32 %v967, %v985
        %v989 = vmul.f32 %v968, %v986
        %v990 = vmax.f32 %v987, 0.0
        %v991 = vmax.f32 %v988, 0.0
        %v992 = vmax.f32 %v989, 0.0
        %v993 = vmul.f32 %v951, 2.0
        %v994 = vmul.f32 %v952, 2.0
        %v995 = vmul.f32 %v953, 2.0
        %v996 = vadd.f32 %v993, 6.5025
        %v997 = vadd.f32 %v994, 6.5025
        %v998 = vadd.f32 %v995, 6.5025
        %v999 = vadd.f32 %v945, %v948
        %v1000 = vadd.f32 %v946, %v949
        %v1001 = vadd.f32 %v947, %v950
        %v1002 = vadd.f32 %v999, 6.5025
        %v1003 = vadd.f32 %v1000, 6.5025
        %v1004 = vadd.f32 %v1001, 6.5025
        %v1005 = vrcp.pop %v1002
        %v1006 = vrcp.pop %v1003
        %v1007 = vrcp.pop %v1004
        %v1008 = vmul.f32 %v1002, %v1005
        %v1009 = vmul.f32 %v1003, %v1006
        %v1010 = vmul.f32 %v1004, %v1007
        %v1011 = vsub.f32 2.0, %v1008
        %v1012 = vsub.f32 2.0, %v1009
        %v1013 = vsub.f32 2.0, %v1010
        %v1014 = vmul.f32 %v1005, %v1011
        %v1015 = vmul.f32 %v1006, %v1012
        %v1016 = vmul.f32 %v1007, %v1013
        %v1017 = vmul.f32 %v996, %v1014
        %v1018 = vmul.f32 %v997, %v1015
        %v1019 = vmul.f32 %v998, %v1016
        %v1020 = vmul.f32 %v1017, %v990
        %v1021 = vmul.f32 %v1018, %v991
        %v1022 = vmul.f32 %v1019, %v992
        %v1023 = vlaneseq
        %v1024 = vshrl.u32 %v1023, 7
        %v1025 = vlaneseq
        %v1026 = vand.u32 %v1025, 127
        %v1027 = vadd.s32 %v1026, 128
        %v1028 = vadd.s32 %v1026, 256
        %vm1029 = vcmp.lt.s32.totalorder %v1026, 0
        %v1030 = vsub.s32 0, %v1026
        %v1031 = vsel %vm1029, %v1030, %v1026
        %v1032 = vshrl.u32 %v1031, 7
        %v1033 = vand.u32 %v1031, 127
        %v1034 = vsub.s32 0, %v1033
        %v1035 = vsel %vm1029, %v1034, %v1033
        %vm1036 = vcmp.lt.s32.totalorder %v1027, 0
        %v1037 = vsub.s32 0, %v1027
        %v1038 = vsel %vm1036, %v1037, %v1027
        %v1039 = vshrl.u32 %v1038, 7
        %v1040 = vand.u32 %v1038, 127
        %v1041 = vsub.s32 0, %v1040
        %v1042 = vsel %vm1036, %v1041, %v1040
        %vm1043 = vcmp.lt.s32.totalorder %v1028, 0
        %v1044 = vsub.s32 0, %v1028
        %v1045 = vsel %vm1043, %v1044, %v1028
        %v1046 = vshrl.u32 %v1045, 7
        %v1047 = vand.u32 %v1045, 127
        %v1048 = vsub.s32 0, %v1047
        %v1049 = vsel %vm1043, %v1048, %v1047
        %vm1050 = vcmp.ne.s32.totalorder %v1035, 0
        %vm1051 = vcmp.ne.s32.totalorder %v1042, 0
        %vm1052 = vcmp.ne.s32.totalorder %v1049, 0
        %vm1053 = vcmp.lt.s32.totalorder %v1035, 0
        %vm1054 = vcmp.lt.s32.totalorder %v1042, 0
        %vm1055 = vcmp.lt.s32.totalorder %v1049, 0
        %vm1056 = vmand %vm1053, %vm1050
        %vm1057 = vmand %vm1054, %vm1051
        %vm1058 = vmand %vm1055, %vm1052
        %v1059 = vadd.s32 %v1035, 128
        %v1060 = vadd.s32 %v1042, 128
        %v1061 = vadd.s32 %v1049, 128
        %v1062 = vsel %vm1056, %v1059, %v1035
        %v1063 = vsel %vm1057, %v1060, %v1042
        %v1064 = vsel %vm1058, %v1061, %v1049
        %vm1065 = vcmp.lt.s32.totalorder %v1024, 6
        %vm1066 = vcmp.lt.s32.totalorder %v1062, 6
        %vm1067 = vcmp.lt.s32.totalorder %v1063, 6
        %vm1068 = vcmp.lt.s32.totalorder %v1064, 6
        %vm1069 = vmand %vm1065, %vm1066
        %vm1070 = vmand %vm1065, %vm1067
        %vm1071 = vmand %vm1065, %vm1068
        %v1072 = vsel %vm1069, %v1020, 0.0
        %v1073 = vsel %vm1070, %v1021, 0.0
        %v1074 = vsel %vm1071, %v1022, 0.0
        %v1075 = vadd.f32 %v1072, %v1073
        %v1076 = vadd.f32 %v1075, %v1074
        %v1077 = vadd.f32 %v1076, 0.0
        %1078 = vst [vmem:[%s290] sm:$0xff] %v1077
        %s1079 = sand.u32 %s127, 1
        %s1080 = scalar_lea.sflag [#allocation6], %s1079
        %s1081 = sand.u32 %s127, 1
        %s1082 = smul.addr %s1081, 8
        %s1083 = scalar_lea.vmem [#allocation12], %s1082
        // Predicated region
        $region53: #{tpu_custom_call.1} parent=35 // pred_check
          %p1084 = pneg %p137
        $region54: #{tpu_custom_call.1} parent=35 // pred_check_branch
          %1086 = sbr.rel (%p1084) target = $region56
        $region55: #{tpu_custom_call.1} parent=35 // pred_region
          %1088 = vsyncadd %s1080, 0
          %s1089 = smul.addr %s25, 8
          %s1090 = scalar_lea.hbm %s4, %s1089
          %s1092 = sshll.u32 %s1083, 4
          %s1093 = int_to_ptr.vmem [resolvable:$true] %s1092
          %s1094 = sshll.u32 %s1090, 4
          %s1095 = int_to_ptr.hbm [resolvable:$true] %s1094
          %1097 = dma.vmem_to_hbm [thread:$0]  %s1093, 128, %s1095, %s1080
        $region56: #{tpu_custom_call.1} parent=35 // pred_fallthru
          _
      $region36: #{tpu_custom_call.1} parent=5 // pred_fallthru
        _
      %p1098 = scmp.le.s32.totalorder 2, %s20
      // Predicated region
      $region57: #{tpu_custom_call.1} parent=5 // pred_check
        %p1099 = pneg %p1098
      $region58: #{tpu_custom_call.1} parent=5 // pred_check_branch
        %1101 = sbr.rel (%p1099) target = $region60
      $region59: #{tpu_custom_call.1} parent=5 // pred_region
        %s1102 = ssub.s32 %s20, 2
        // Predicated region
        $region61: #{tpu_custom_call.1} parent=59 // pred_check
          %p1103 = pneg %p143
        $region62: #{tpu_custom_call.1} parent=59 // pred_check_branch
          %1105 = sbr.rel (%p1103) target = $region64
        $region63: #{tpu_custom_call.1} parent=59 // pred_region
          %s1106 = sand.u32 %s128, 1
          %s1107 = scalar_lea.sflag [#allocation6], %s1106
          %s1108 = sand.u32 %s128, 1
          %s1109 = smul.addr %s1108, 8
          %s1110 = scalar_lea.vmem [#allocation12], %s1109
          %1112 = dma.done %s1107, 128
        $region64: #{tpu_custom_call.1} parent=59 // pred_fallthru
          _
      $region60: #{tpu_custom_call.1} parent=5 // pred_fallthru
        _
    $region6: #{tpu_custom_call.1} parent=1 // loop_footer
      %s24 = sadd.s32 1, %s20
    $region7: #{tpu_custom_call.1} parent=1 // loop_footer_branch
      %19 = sbr.rel target = $region3
    $region8: #{tpu_custom_call.1} parent=1 // loop_exit
      _
    %1113 = vsyncpa [#allocation5], 1
    %s1114 = scalar_lea.sflag [#allocation5], 1
    %1115 = vsyncpa %s1114, 1
    %1116 = vsyncpa [#allocation8], 1
    %s1117 = scalar_lea.sflag [#allocation8], 1
    %1118 = vsyncpa %s1117, 1
    %1119 = vsyncpa [#allocation11], 1
    %1120 = vsyncpa [#allocation6], 1
    %s1121 = scalar_lea.sflag [#allocation6], 1
    %1122 = vsyncpa %s1121, 1

</llo_original>
